<compile_context>
chip_gen: v6e
topology: v6e:2x2x1
jax: 0.10.0
libtpu: 0.0.40
codegen_flags: <defaults>
</compile_context>

<pallas_src>
import functools

import jax
import jax.numpy as jnp
from jax import lax
from jax.experimental import pallas as pl
from jax.experimental.pallas import tpu as pltpu


def attn_gru_kernel(x_ref, h0_ref, gt_ref,
                    wr_ref, ur_ref, brc_ref,
                    wn_ref, bn_ref, un_ref, cn_ref,
                    h_ref):
    """One (batch block, time chunk) grid step of the AttnGRU recurrence.

    x_ref:  (Bt, Tc, H) input chunk (compute dtype)
    h0_ref: (Bt, H)     initial hidden state (f32)
    gt_ref: (Bt, 1)     attention gate (f32)
    wr/ur/wn/un: (H, H) weights pre-transposed to (in, out) (compute dtype)
    brc:    (1, H)      folded bias br + cr (f32)
    bn:     (1, H)      bias of W (f32)
    cn:     (1, H)      bias of U (f32; must stay inside rt * (h @ U + cn))
    h_ref:  (Bt, H)     output block; also carries h across time chunks (f32)
    """
    c = pl.program_id(1)              # time-chunk axis ("arbitrary", sequential)
    Bt, Tc, H = x_ref.shape
    f32 = jnp.float32

    # Initialise the carried hidden state at the first time chunk of every
    # batch block (c resets to 0 whenever the batch-block axis advances).
    @pl.when(c == 0)
    def _():
        h_ref[...] = h0_ref[...]

    w_dtype = wr_ref.dtype

    # ---- Hoisted input projections --------------------------------------
    # One (Bt*Tc, H) x (H, H) matmul per gate instead of two tiny (Bt, H)
    # matmuls per timestep.  Tc is chosen as a multiple of 8 by the wrapper so
    # these reshapes are layout-trivial (no relayout).
    x2 = x_ref[...].reshape(Bt * Tc, H)
    xr_all = (jnp.dot(x2, wr_ref[...], preferred_element_type=f32)
              + brc_ref[...]).reshape(Bt, Tc, H)
    xn_all = (jnp.dot(x2, wn_ref[...], preferred_element_type=f32)
              + bn_ref[...]).reshape(Bt, Tc, H)

    ur = ur_ref[...]
    un = un_ref[...]

    # Hoist every per-step broadcast out of the recurrence (JAX does not CSE
    # broadcast_in_dim inside a loop).
    gt_b = jnp.broadcast_to(gt_ref[...], (Bt, H))
    one_minus_gt = 1.0 - gt_b
    cn_b = jnp.broadcast_to(cn_ref[...], (Bt, H))

    # ---- Sequential recurrence over this chunk (static, fully unrolled) --
    h = h_ref[...]
    for t in range(Tc):               # Python loop over a static block size
        hc = h.astype(w_dtype)        # bf16 weights => cast h for the MXU
        rt = jax.nn.sigmoid(
            xr_all[:, t, :]
            + jnp.dot(hc, ur, preferred_element_type=f32))
        nt = jnp.tanh(
            xn_all[:, t, :]
            + rt * (jnp.dot(hc, un, preferred_element_type=f32) + cn_b))
        h = one_minus_gt * nt + gt_b * h
    h_ref[...] = h


def _pick_time_chunk(T, max_chunk):
    """Largest divisor of T that is <= max_chunk, preferring multiples of 8
    (keeps the in-kernel (Bt, Tc, H) <-> (Bt*Tc, H) reshapes layout-trivial)."""
    divisors = [c for c in range(1, min(T, max_chunk) + 1) if T % c == 0]
    mult8 = [c for c in divisors if c % 8 == 0]
    return max(mult8) if mult8 else max(divisors)


@functools.partial(
    jax.jit,
    static_argnames=("compute_dtype", "max_time_chunk", "batch_block",
                     "vmem_limit_bytes"))
def attn_gru_pallas(x, h0, gt, params, *, compute_dtype=None,
                    max_time_chunk=32, batch_block=None,
                    vmem_limit_bytes=None):
    """AttnGRU forward.  x: (B, T, H), h0: (B, H), gt: (B, 1).

    params: 12-tuple (wr, br, ur, cr, wz, bz, uz, cz, wn, bn, un, cn) -- the
    full parameter set of the PyTorch module, weights pre-transposed to
    (in, out), biases shaped (1, H).  The z-gate parameters are dead in the
    module's forward and are not passed to the kernel.
    """
    (wr, br, ur, cr, _wz, _bz, _uz, _cz, wn, bn, un, cn) = params
    B, T, H = x.shape
    f32 = jnp.float32
    if compute_dtype is None:
        compute_dtype = x.dtype

    # ---- tiling ----------------------------------------------------------
    Tc = _pick_time_chunk(T, max_time_chunk)
    if batch_block is None or batch_block >= B:
        Bt = B
    else:
        assert B % batch_block == 0, "batch_block must divide B"
        assert batch_block % 8 == 0, "batch_block must be a multiple of 8"
        Bt = batch_block
    nb, nc = B // Bt, T // Tc

    # ---- dtype casts + bias folding (review items) -------------------------
    xc = x.astype(compute_dtype)
    wrc, urc = wr.astype(compute_dtype), ur.astype(compute_dtype)
    wnc, unc = wn.astype(compute_dtype), un.astype(compute_dtype)
    brc = (br + cr).astype(f32).reshape(1, H)   # sigmoid(x@Wr + br + h@Ur + cr)
    bnb = bn.astype(f32).reshape(1, H)
    cnb = cn.astype(f32).reshape(1, H)          # stays inside rt * (h@U + cn)
    h0f = h0.astype(f32)
    gtf = gt.astype(f32)

    itemsize = jnp.dtype(compute_dtype).itemsize
    cost = pl.CostEstimate(
        flops=8 * T * B * H * H,                # 4 matmuls (2 input, 2 recurrent)
        transcendentals=3 * T * B * H,          # sigmoid + tanh per step
        bytes_accessed=int(B * T * H * itemsize         # x (streamed)
                           + 4 * H * H * itemsize       # resident weights
                           + (3 * H + 3 * B * H + B) * 4))

    const = lambda b, c: (0, 0)
    grid_spec = pltpu.PrefetchScalarGridSpec(
        num_scalar_prefetch=0,
        grid=(nb, nc),                          # (batch blocks, time chunks)
        in_specs=[
            pl.BlockSpec((Bt, Tc, H), lambda b, c: (b, c, 0)),  # x streams over T
            pl.BlockSpec((Bt, H), lambda b, c: (b, 0)),         # h0
            pl.BlockSpec((Bt, 1), lambda b, c: (b, 0)),         # gt
            pl.BlockSpec((H, H), const),                        # Wr
            pl.BlockSpec((H, H), const),                        # Ur
            pl.BlockSpec((1, H), const),                        # br + cr
            pl.BlockSpec((H, H), const),                        # W
            pl.BlockSpec((1, H), const),                        # bn
            pl.BlockSpec((H, H), const),                        # U
            pl.BlockSpec((1, H), const),                        # cn
        ],
        out_specs=pl.BlockSpec((Bt, H), lambda b, c: (b, 0)),   # h carry / output
    )

    cp = dict(dimension_semantics=("parallel", "arbitrary"))
    if vmem_limit_bytes is not None:
        # NOTE(v7x): 64 MiB physical VMEM -- for large H use compute_dtype=bf16,
        # a smaller max_time_chunk, and set this limit explicitly with headroom.
        cp["vmem_limit_bytes"] = vmem_limit_bytes

    return pl.pallas_call(
        attn_gru_kernel,
        out_shape=jax.ShapeDtypeStruct((B, H), f32),
        grid_spec=grid_spec,
        compiler_params=pltpu.CompilerParams(**cp),
        cost_estimate=cost,
    )(xc, h0f, gtf, wrc, urc, brc, wnc, bnb, unc, cnb)


def attn_gru_ref(x, h0, gt, params, compute_dtype=None):
    """Pure-JAX reference mirroring the PyTorch forward (zt is dead code).

    When compute_dtype is bf16 it mirrors the kernel's casting (x / weights /
    recurrent h rounded to bf16, accumulation kept in f32)."""
    (wr, br, ur, cr, _wz, _bz, _uz, _cz, wn, bn, un, cn) = params
    f32 = jnp.float32
    if compute_dtype is None:
        compute_dtype = x.dtype
    cast = lambda a: a.astype(compute_dtype).astype(f32)
    xc = cast(x)
    wrc, urc, wnc, unc = cast(wr), cast(ur), cast(wn), cast(un)
    hp = lax.Precision.HIGHEST
    h = h0.astype(f32)
    gt = gt.astype(f32)
    for t in range(x.shape[1]):
        xt = xc[:, t, :]
        hc = cast(h)
        rt = jax.nn.sigmoid(jnp.dot(xt, wrc, precision=hp) + br
                            + jnp.dot(hc, urc, precision=hp) + cr)
        nt = jnp.tanh(jnp.dot(xt, wnc, precision=hp) + bn
                      + rt * (jnp.dot(hc, unc, precision=hp) + cn))
        h = (1.0 - gt) * nt + gt * h
    return h


def init_params(key, hidden_size):
    """nn.Linear-style init U(-1/sqrt(H), 1/sqrt(H)) for the six layers
    (Wr, Ur, Wz, Uz, W, U).  Weights are returned transposed to (in, out) so
    the kernel computes y = x @ W + b; biases are (1, H) rows."""
    bound = 1.0 / jnp.sqrt(hidden_size)
    params = []
    for _ in range(6):
        key, kw, kb = jax.random.split(key, 3)
        w_pt = jax.random.uniform(kw, (hidden_size, hidden_size),
                                  jnp.float32, -bound, bound)   # PyTorch (out, in)
        b_pt = jax.random.uniform(kb, (hidden_size,),
                                  jnp.float32, -bound, bound)
        params.append(w_pt.T)                    # (in, out)
        params.append(b_pt.reshape(1, hidden_size))
    # order: wr, br, ur, cr, wz, bz, uz, cz, wn, bn, un, cn
    return tuple(params)


if __name__ == "__main__":
    key = jax.random.PRNGKey(0)

    # --- Config 1: small f32 shapes (module-scale sanity check) ------------
    B, T, H = 2, 8, 32
    key, k_x, k_h, k_g, k_p = jax.random.split(key, 5)
    x = jax.random.normal(k_x, (B, T, H), jnp.float32)
    h0 = jax.random.normal(k_h, (B, H), jnp.float32)
    gt = jax.random.uniform(k_g, (B, 1), jnp.float32)   # attention gate
    params = init_params(k_p, H)

    out = jax.block_until_ready(attn_gru_pallas(x, h0, gt, params))
    ref = attn_gru_ref(x, h0, gt, params)
    assert out.shape == (B, H)
    assert jnp.allclose(out, ref, atol=1e-4, rtol=1e-4), \
        "f32 Pallas output mismatch vs JAX reference"

    # --- Config 2: lane-aligned bf16 config exercising batch tiling
    #     (2 "parallel" batch blocks for v7x's two TensorCores) and the
    #     hidden-state carry across multiple time chunks. -------------------
    B2, T2, H2 = 16, 32, 128
    key, k_x, k_h, k_g, k_p = jax.random.split(key, 5)
    x2 = jax.random.normal(k_x, (B2, T2, H2), jnp.float32)
    h02 = jax.random.normal(k_h, (B2, H2), jnp.float32)
    gt2 = jax.random.uniform(k_g, (B2, 1), jnp.float32)
    params2 = init_params(k_p, H2)

    out2 = jax.block_until_ready(
        attn_gru_pallas(x2, h02, gt2, params2, compute_dtype=jnp.bfloat16,
                        max_time_chunk=8, batch_block=8))
    ref2 = attn_gru_ref(x2, h02, gt2, params2, compute_dtype=jnp.bfloat16)
    assert out2.shape == (B2, H2)
    assert jnp.allclose(out2, ref2, atol=2e-3, rtol=2e-3), \
        "bf16 Pallas output mismatch vs JAX reference"

    print("KERNEL_OK")
</pallas_src>

<mosaic_0001>
module attributes {stable_mosaic.version = 11 : i64} {
  func.func @attn_gru_kernel(%arg0: i32, %arg1: i32, %arg2: memref<2x8x32xf32, #tpu.memory_space<vmem>>, %arg3: memref<2x32xf32, #tpu.memory_space<vmem>>, %arg4: memref<2x1xf32, #tpu.memory_space<vmem>>, %arg5: memref<32x32xf32, #tpu.memory_space<vmem>>, %arg6: memref<32x32xf32, #tpu.memory_space<vmem>>, %arg7: memref<1x32xf32, #tpu.memory_space<vmem>>, %arg8: memref<32x32xf32, #tpu.memory_space<vmem>>, %arg9: memref<1x32xf32, #tpu.memory_space<vmem>>, %arg10: memref<32x32xf32, #tpu.memory_space<vmem>>, %arg11: memref<1x32xf32, #tpu.memory_space<vmem>>, %arg12: memref<2x32xf32, #tpu.memory_space<vmem>>) attributes {dimension_semantics = [#tpu.dimension_semantics<parallel>, #tpu.dimension_semantics<arbitrary>], iteration_bounds = array<i64: 1, 1>, scalar_prefetch = 0 : i64, scratch_operands = 0 : i64, tpu.core_type = #tpu.core_type<tc>, window_params = [{transform_indices = @transform_0, window_bounds = array<i64: 2, 8, 32>}, {transform_indices = @transform_1, window_bounds = array<i64: 2, 32>}, {transform_indices = @transform_2, window_bounds = array<i64: 2, 1>}, {pipeline_mode = #tpu.pipeline_mode<synchronous>, transform_indices = @transform_3, window_bounds = array<i64: 32, 32>}, {pipeline_mode = #tpu.pipeline_mode<synchronous>, transform_indices = @transform_4, window_bounds = array<i64: 32, 32>}, {pipeline_mode = #tpu.pipeline_mode<synchronous>, transform_indices = @transform_5, window_bounds = array<i64: 1, 32>}, {pipeline_mode = #tpu.pipeline_mode<synchronous>, transform_indices = @transform_6, window_bounds = array<i64: 32, 32>}, {pipeline_mode = #tpu.pipeline_mode<synchronous>, transform_indices = @transform_7, window_bounds = array<i64: 1, 32>}, {pipeline_mode = #tpu.pipeline_mode<synchronous>, transform_indices = @transform_8, window_bounds = array<i64: 32, 32>}, {pipeline_mode = #tpu.pipeline_mode<synchronous>, transform_indices = @transform_9, window_bounds = array<i64: 1, 32>}, {transform_indices = @transform_10, window_bounds = array<i64: 2, 32>}]} {
    %c0_i32 = arith.constant 0 : i32
    %0 = arith.cmpi eq, %arg1, %c0_i32 : i32
    %1 = arith.extui %0 : i1 to i32
    %c0_i32_0 = arith.constant 0 : i32
    %2 = arith.cmpi ne, %1, %c0_i32_0 : i32
    scf.if %2 {
      %c0_49 = arith.constant 0 : index
      %c0_50 = arith.constant 0 : index
      %181 = vector.load %arg3[%c0_49, %c0_50] : memref<2x32xf32, #tpu.memory_space<vmem>>, vector<2x32xf32>
      %c0_51 = arith.constant 0 : index
      %c0_52 = arith.constant 0 : index
      %182 = vector.load %arg12[%c0_51, %c0_52] : memref<2x32xf32, #tpu.memory_space<vmem>>, vector<2x32xf32>
      tpu.vector_store %arg12[%c0_51, %c0_52], %181 {strides = array<i32>} : memref<2x32xf32, #tpu.memory_space<vmem>>, vector<2x32xf32>,
    } else {
    }
    %c0 = arith.constant 0 : index
    %c0_1 = arith.constant 0 : index
    %c0_2 = arith.constant 0 : index
    %3 = vector.load %arg2[%c0, %c0_1, %c0_2] : memref<2x8x32xf32, #tpu.memory_space<vmem>>, vector<2x8x32xf32>
    %4 = vector.shape_cast %3 : vector<2x8x32xf32> to vector<16x32xf32>
    %c0_3 = arith.constant 0 : index
    %c0_4 = arith.constant 0 : index
    %5 = vector.load %arg5[%c0_3, %c0_4] : memref<32x32xf32, #tpu.memory_space<vmem>>, vector<32x32xf32>
    %cst = arith.constant dense<0.000000e+00> : vector<16x32xf32>
    %6 = tpu.matmul %4, %5, %cst {dimension_numbers = #tpu.dot_dimension_numbers<[1], [0], [0], [1], [0, 0, 1, 1], [], []>} : vector<16x32xf32>, vector<32x32xf32>, vector<16x32xf32> -> vector<16x32xf32>
    %c0_5 = arith.constant 0 : index
    %c0_6 = arith.constant 0 : index
    %7 = vector.load %arg7[%c0_5, %c0_6] : memref<1x32xf32, #tpu.memory_space<vmem>>, vector<1x32xf32>
    %8 = vector.broadcast %7 : vector<1x32xf32> to vector<16x32xf32>
    %9 = arith.addf %6, %8 : vector<16x32xf32>
    %10 = vector.shape_cast %9 : vector<16x32xf32> to vector<2x8x32xf32>
    %c0_7 = arith.constant 0 : index
    %c0_8 = arith.constant 0 : index
    %11 = vector.load %arg8[%c0_7, %c0_8] : memref<32x32xf32, #tpu.memory_space<vmem>>, vector<32x32xf32>
    %cst_9 = arith.constant dense<0.000000e+00> : vector<16x32xf32>
    %12 = tpu.matmul %4, %11, %cst_9 {dimension_numbers = #tpu.dot_dimension_numbers<[1], [0], [0], [1], [0, 0, 1, 1], [], []>} : vector<16x32xf32>, vector<32x32xf32>, vector<16x32xf32> -> vector<16x32xf32>
    %c0_10 = arith.constant 0 : index
    %c0_11 = arith.constant 0 : index
    %13 = vector.load %arg9[%c0_10, %c0_11] : memref<1x32xf32, #tpu.memory_space<vmem>>, vector<1x32xf32>
    %14 = vector.broadcast %13 : vector<1x32xf32> to vector<16x32xf32>
    %15 = arith.addf %12, %14 : vector<16x32xf32>
    %16 = vector.shape_cast %15 : vector<16x32xf32> to vector<2x8x32xf32>
    %c0_12 = arith.constant 0 : index
    %c0_13 = arith.constant 0 : index
    %17 = vector.load %arg6[%c0_12, %c0_13] : memref<32x32xf32, #tpu.memory_space<vmem>>, vector<32x32xf32>
    %c0_14 = arith.constant 0 : index
    %c0_15 = arith.constant 0 : index
    %18 = vector.load %arg10[%c0_14, %c0_15] : memref<32x32xf32, #tpu.memory_space<vmem>>, vector<32x32xf32>
    %c0_16 = arith.constant 0 : index
    %c0_17 = arith.constant 0 : index
    %19 = vector.load %arg4[%c0_16, %c0_17] : memref<2x1xf32, #tpu.memory_space<vmem>>, vector<2x1xf32>
    %20 = vector.shape_cast %19 : vector<2x1xf32> to vector<2x1xf32>
    %21 = vector.broadcast %20 : vector<2x1xf32> to vector<2x32xf32>
    %cst_18 = arith.constant 1.000000e+00 : f32
    %22 = vector.broadcast %cst_18 : f32 to vector<2x32xf32>
    %23 = arith.subf %22, %21 : vector<2x32xf32>
    %c0_19 = arith.constant 0 : index
    %c0_20 = arith.constant 0 : index
    %24 = vector.load %arg11[%c0_19, %c0_20] : memref<1x32xf32, #tpu.memory_space<vmem>>, vector<1x32xf32>
    %25 = vector.shape_cast %24 : vector<1x32xf32> to vector<1x32xf32>
    %26 = vector.broadcast %25 : vector<1x32xf32> to vector<2x32xf32>
    %c0_21 = arith.constant 0 : index
    %c0_22 = arith.constant 0 : index
    %27 = vector.load %arg12[%c0_21, %c0_22] : memref<2x32xf32, #tpu.memory_space<vmem>>, vector<2x32xf32>
    %28 = vector.extract_strided_slice %10 {offsets = [0, 0, 0], sizes = [2, 1, 32], strides = [1, 1, 1]} : vector<2x8x32xf32> to vector<2x1x32xf32>
    %29 = vector.shape_cast %28 : vector<2x1x32xf32> to vector<2x32xf32>
    %cst_23 = arith.constant dense<0.000000e+00> : vector<2x32xf32>
    %30 = tpu.matmul %27, %17, %cst_23 {dimension_numbers = #tpu.dot_dimension_numbers<[1], [0], [0], [1], [0, 0, 1, 1], [], []>} : vector<2x32xf32>, vector<32x32xf32>, vector<2x32xf32> -> vector<2x32xf32>
    %31 = arith.addf %29, %30 : vector<2x32xf32>
    %32 = arith.negf %31 : vector<2x32xf32>
    %33 = math.exp %32 : vector<2x32xf32>
    %cst_24 = arith.constant 1.000000e+00 : f32
    %34 = vector.broadcast %cst_24 : f32 to vector<2x32xf32>
    %35 = arith.addf %34, %33 : vector<2x32xf32>
    %36 = arith.divf %34, %35 : vector<2x32xf32>
    %37 = vector.extract_strided_slice %16 {offsets = [0, 0, 0], sizes = [2, 1, 32], strides = [1, 1, 1]} : vector<2x8x32xf32> to vector<2x1x32xf32>
    %38 = vector.shape_cast %37 : vector<2x1x32xf32> to vector<2x32xf32>
    %cst_25 = arith.constant dense<0.000000e+00> : vector<2x32xf32>
    %39 = tpu.matmul %27, %18, %cst_25 {dimension_numbers = #tpu.dot_dimension_numbers<[1], [0], [0], [1], [0, 0, 1, 1], [], []>} : vector<2x32xf32>, vector<32x32xf32>, vector<2x32xf32> -> vector<2x32xf32>
    %40 = arith.addf %39, %26 : vector<2x32xf32>
    %41 = arith.mulf %36, %40 : vector<2x32xf32>
    %42 = arith.addf %38, %41 : vector<2x32xf32>
    %43 = math.tanh %42 : vector<2x32xf32>
    %44 = arith.mulf %23, %43 : vector<2x32xf32>
    %45 = arith.mulf %21, %27 : vector<2x32xf32>
    %46 = arith.addf %44, %45 : vector<2x32xf32>
    %47 = vector.extract_strided_slice %10 {offsets = [0, 1, 0], sizes = [2, 1, 32], strides = [1, 1, 1]} : vector<2x8x32xf32> to vector<2x1x32xf32>
    %48 = vector.shape_cast %47 : vector<2x1x32xf32> to vector<2x32xf32>
    %cst_26 = arith.constant dense<0.000000e+00> : vector<2x32xf32>
    %49 = tpu.matmul %46, %17, %cst_26 {dimension_numbers = #tpu.dot_dimension_numbers<[1], [0], [0], [1], [0, 0, 1, 1], [], []>} : vector<2x32xf32>, vector<32x32xf32>, vector<2x32xf32> -> vector<2x32xf32>
    %50 = arith.addf %48, %49 : vector<2x32xf32>
    %51 = arith.negf %50 : vector<2x32xf32>
    %52 = math.exp %51 : vector<2x32xf32>
    %cst_27 = arith.constant 1.000000e+00 : f32
    %53 = vector.broadcast %cst_27 : f32 to vector<2x32xf32>
    %54 = arith.addf %53, %52 : vector<2x32xf32>
    %55 = arith.divf %53, %54 : vector<2x32xf32>
    %56 = vector.extract_strided_slice %16 {offsets = [0, 1, 0], sizes = [2, 1, 32], strides = [1, 1, 1]} : vector<2x8x32xf32> to vector<2x1x32xf32>
    %57 = vector.shape_cast %56 : vector<2x1x32xf32> to vector<2x32xf32>
    %cst_28 = arith.constant dense<0.000000e+00> : vector<2x32xf32>
    %58 = tpu.matmul %46, %18, %cst_28 {dimension_numbers = #tpu.dot_dimension_numbers<[1], [0], [0], [1], [0, 0, 1, 1], [], []>} : vector<2x32xf32>, vector<32x32xf32>, vector<2x32xf32> -> vector<2x32xf32>
    %59 = arith.addf %58, %26 : vector<2x32xf32>
    %60 = arith.mulf %55, %59 : vector<2x32xf32>
    %61 = arith.addf %57, %60 : vector<2x32xf32>
    %62 = math.tanh %61 : vector<2x32xf32>
    %63 = arith.mulf %23, %62 : vector<2x32xf32>
    %64 = arith.mulf %21, %46 : vector<2x32xf32>
    %65 = arith.addf %63, %64 : vector<2x32xf32>
    %66 = vector.extract_strided_slice %10 {offsets = [0, 2, 0], sizes = [2, 1, 32], strides = [1, 1, 1]} : vector<2x8x32xf32> to vector<2x1x32xf32>
    %67 = vector.shape_cast %66 : vector<2x1x32xf32> to vector<2x32xf32>
    %cst_29 = arith.constant dense<0.000000e+00> : vector<2x32xf32>
    %68 = tpu.matmul %65, %17, %cst_29 {dimension_numbers = #tpu.dot_dimension_numbers<[1], [0], [0], [1], [0, 0, 1, 1], [], []>} : vector<2x32xf32>, vector<32x32xf32>, vector<2x32xf32> -> vector<2x32xf32>
    %69 = arith.addf %67, %68 : vector<2x32xf32>
    %70 = arith.negf %69 : vector<2x32xf32>
    %71 = math.exp %70 : vector<2x32xf32>
    %cst_30 = arith.constant 1.000000e+00 : f32
    %72 = vector.broadcast %cst_30 : f32 to vector<2x32xf32>
    %73 = arith.addf %72, %71 : vector<2x32xf32>
    %74 = arith.divf %72, %73 : vector<2x32xf32>
    %75 = vector.extract_strided_slice %16 {offsets = [0, 2, 0], sizes = [2, 1, 32], strides = [1, 1, 1]} : vector<2x8x32xf32> to vector<2x1x32xf32>
    %76 = vector.shape_cast %75 : vector<2x1x32xf32> to vector<2x32xf32>
    %cst_31 = arith.constant dense<0.000000e+00> : vector<2x32xf32>
    %77 = tpu.matmul %65, %18, %cst_31 {dimension_numbers = #tpu.dot_dimension_numbers<[1], [0], [0], [1], [0, 0, 1, 1], [], []>} : vector<2x32xf32>, vector<32x32xf32>, vector<2x32xf32> -> vector<2x32xf32>
    %78 = arith.addf %77, %26 : vector<2x32xf32>
    %79 = arith.mulf %74, %78 : vector<2x32xf32>
    %80 = arith.addf %76, %79 : vector<2x32xf32>
    %81 = math.tanh %80 : vector<2x32xf32>
    %82 = arith.mulf %23, %81 : vector<2x32xf32>
    %83 = arith.mulf %21, %65 : vector<2x32xf32>
    %84 = arith.addf %82, %83 : vector<2x32xf32>
    %85 = vector.extract_strided_slice %10 {offsets = [0, 3, 0], sizes = [2, 1, 32], strides = [1, 1, 1]} : vector<2x8x32xf32> to vector<2x1x32xf32>
    %86 = vector.shape_cast %85 : vector<2x1x32xf32> to vector<2x32xf32>
    %cst_32 = arith.constant dense<0.000000e+00> : vector<2x32xf32>
    %87 = tpu.matmul %84, %17, %cst_32 {dimension_numbers = #tpu.dot_dimension_numbers<[1], [0], [0], [1], [0, 0, 1, 1], [], []>} : vector<2x32xf32>, vector<32x32xf32>, vector<2x32xf32> -> vector<2x32xf32>
    %88 = arith.addf %86, %87 : vector<2x32xf32>
    %89 = arith.negf %88 : vector<2x32xf32>
    %90 = math.exp %89 : vector<2x32xf32>
    %cst_33 = arith.constant 1.000000e+00 : f32
    %91 = vector.broadcast %cst_33 : f32 to vector<2x32xf32>
    %92 = arith.addf %91, %90 : vector<2x32xf32>
    %93 = arith.divf %91, %92 : vector<2x32xf32>
    %94 = vector.extract_strided_slice %16 {offsets = [0, 3, 0], sizes = [2, 1, 32], strides = [1, 1, 1]} : vector<2x8x32xf32> to vector<2x1x32xf32>
    %95 = vector.shape_cast %94 : vector<2x1x32xf32> to vector<2x32xf32>
    %cst_34 = arith.constant dense<0.000000e+00> : vector<2x32xf32>
    %96 = tpu.matmul %84, %18, %cst_34 {dimension_numbers = #tpu.dot_dimension_numbers<[1], [0], [0], [1], [0, 0, 1, 1], [], []>} : vector<2x32xf32>, vector<32x32xf32>, vector<2x32xf32> -> vector<2x32xf32>
    %97 = arith.addf %96, %26 : vector<2x32xf32>
    %98 = arith.mulf %93, %97 : vector<2x32xf32>
    %99 = arith.addf %95, %98 : vector<2x32xf32>
    %100 = math.tanh %99 : vector<2x32xf32>
    %101 = arith.mulf %23, %100 : vector<2x32xf32>
    %102 = arith.mulf %21, %84 : vector<2x32xf32>
    %103 = arith.addf %101, %102 : vector<2x32xf32>
    %104 = vector.extract_strided_slice %10 {offsets = [0, 4, 0], sizes = [2, 1, 32], strides = [1, 1, 1]} : vector<2x8x32xf32> to vector<2x1x32xf32>
    %105 = vector.shape_cast %104 : vector<2x1x32xf32> to vector<2x32xf32>
    %cst_35 = arith.constant dense<0.000000e+00> : vector<2x32xf32>
    %106 = tpu.matmul %103, %17, %cst_35 {dimension_numbers = #tpu.dot_dimension_numbers<[1], [0], [0], [1], [0, 0, 1, 1], [], []>} : vector<2x32xf32>, vector<32x32xf32>, vector<2x32xf32> -> vector<2x32xf32>
    %107 = arith.addf %105, %106 : vector<2x32xf32>
    %108 = arith.negf %107 : vector<2x32xf32>
    %109 = math.exp %108 : vector<2x32xf32>
    %cst_36 = arith.constant 1.000000e+00 : f32
    %110 = vector.broadcast %cst_36 : f32 to vector<2x32xf32>
    %111 = arith.addf %110, %109 : vector<2x32xf32>
    %112 = arith.divf %110, %111 : vector<2x32xf32>
    %113 = vector.extract_strided_slice %16 {offsets = [0, 4, 0], sizes = [2, 1, 32], strides = [1, 1, 1]} : vector<2x8x32xf32> to vector<2x1x32xf32>
    %114 = vector.shape_cast %113 : vector<2x1x32xf32> to vector<2x32xf32>
    %cst_37 = arith.constant dense<0.000000e+00> : vector<2x32xf32>
    %115 = tpu.matmul %103, %18, %cst_37 {dimension_numbers = #tpu.dot_dimension_numbers<[1], [0], [0], [1], [0, 0, 1, 1], [], []>} : vector<2x32xf32>, vector<32x32xf32>, vector<2x32xf32> -> vector<2x32xf32>
    %116 = arith.addf %115, %26 : vector<2x32xf32>
    %117 = arith.mulf %112, %116 : vector<2x32xf32>
    %118 = arith.addf %114, %117 : vector<2x32xf32>
    %119 = math.tanh %118 : vector<2x32xf32>
    %120 = arith.mulf %23, %119 : vector<2x32xf32>
    %121 = arith.mulf %21, %103 : vector<2x32xf32>
    %122 = arith.addf %120, %121 : vector<2x32xf32>
    %123 = vector.extract_strided_slice %10 {offsets = [0, 5, 0], sizes = [2, 1, 32], strides = [1, 1, 1]} : vector<2x8x32xf32> to vector<2x1x32xf32>
    %124 = vector.shape_cast %123 : vector<2x1x32xf32> to vector<2x32xf32>
    %cst_38 = arith.constant dense<0.000000e+00> : vector<2x32xf32>
    %125 = tpu.matmul %122, %17, %cst_38 {dimension_numbers = #tpu.dot_dimension_numbers<[1], [0], [0], [1], [0, 0, 1, 1], [], []>} : vector<2x32xf32>, vector<32x32xf32>, vector<2x32xf32> -> vector<2x32xf32>
    %126 = arith.addf %124, %125 : vector<2x32xf32>
    %127 = arith.negf %126 : vector<2x32xf32>
    %128 = math.exp %127 : vector<2x32xf32>
    %cst_39 = arith.constant 1.000000e+00 : f32
    %129 = vector.broadcast %cst_39 : f32 to vector<2x32xf32>
    %130 = arith.addf %129, %128 : vector<2x32xf32>
    %131 = arith.divf %129, %130 : vector<2x32xf32>
    %132 = vector.extract_strided_slice %16 {offsets = [0, 5, 0], sizes = [2, 1, 32], strides = [1, 1, 1]} : vector<2x8x32xf32> to vector<2x1x32xf32>
    %133 = vector.shape_cast %132 : vector<2x1x32xf32> to vector<2x32xf32>
    %cst_40 = arith.constant dense<0.000000e+00> : vector<2x32xf32>
    %134 = tpu.matmul %122, %18, %cst_40 {dimension_numbers = #tpu.dot_dimension_numbers<[1], [0], [0], [1], [0, 0, 1, 1], [], []>} : vector<2x32xf32>, vector<32x32xf32>, vector<2x32xf32> -> vector<2x32xf32>
    %135 = arith.addf %134, %26 : vector<2x32xf32>
    %136 = arith.mulf %131, %135 : vector<2x32xf32>
    %137 = arith.addf %133, %136 : vector<2x32xf32>
    %138 = math.tanh %137 : vector<2x32xf32>
    %139 = arith.mulf %23, %138 : vector<2x32xf32>
    %140 = arith.mulf %21, %122 : vector<2x32xf32>
    %141 = arith.addf %139, %140 : vector<2x32xf32>
    %142 = vector.extract_strided_slice %10 {offsets = [0, 6, 0], sizes = [2, 1, 32], strides = [1, 1, 1]} : vector<2x8x32xf32> to vector<2x1x32xf32>
    %143 = vector.shape_cast %142 : vector<2x1x32xf32> to vector<2x32xf32>
    %cst_41 = arith.constant dense<0.000000e+00> : vector<2x32xf32>
    %144 = tpu.matmul %141, %17, %cst_41 {dimension_numbers = #tpu.dot_dimension_numbers<[1], [0], [0], [1], [0, 0, 1, 1], [], []>} : vector<2x32xf32>, vector<32x32xf32>, vector<2x32xf32> -> vector<2x32xf32>
    %145 = arith.addf %143, %144 : vector<2x32xf32>
    %146 = arith.negf %145 : vector<2x32xf32>
    %147 = math.exp %146 : vector<2x32xf32>
    %cst_42 = arith.constant 1.000000e+00 : f32
    %148 = vector.broadcast %cst_42 : f32 to vector<2x32xf32>
    %149 = arith.addf %148, %147 : vector<2x32xf32>
    %150 = arith.divf %148, %149 : vector<2x32xf32>
    %151 = vector.extract_strided_slice %16 {offsets = [0, 6, 0], sizes = [2, 1, 32], strides = [1, 1, 1]} : vector<2x8x32xf32> to vector<2x1x32xf32>
    %152 = vector.shape_cast %151 : vector<2x1x32xf32> to vector<2x32xf32>
    %cst_43 = arith.constant dense<0.000000e+00> : vector<2x32xf32>
    %153 = tpu.matmul %141, %18, %cst_43 {dimension_numbers = #tpu.dot_dimension_numbers<[1], [0], [0], [1], [0, 0, 1, 1], [], []>} : vector<2x32xf32>, vector<32x32xf32>, vector<2x32xf32> -> vector<2x32xf32>
    %154 = arith.addf %153, %26 : vector<2x32xf32>
    %155 = arith.mulf %150, %154 : vector<2x32xf32>
    %156 = arith.addf %152, %155 : vector<2x32xf32>
    %157 = math.tanh %156 : vector<2x32xf32>
    %158 = arith.mulf %23, %157 : vector<2x32xf32>
    %159 = arith.mulf %21, %141 : vector<2x32xf32>
    %160 = arith.addf %158, %159 : vector<2x32xf32>
    %161 = vector.extract_strided_slice %10 {offsets = [0, 7, 0], sizes = [2, 1, 32], strides = [1, 1, 1]} : vector<2x8x32xf32> to vector<2x1x32xf32>
    %162 = vector.shape_cast %161 : vector<2x1x32xf32> to vector<2x32xf32>
    %cst_44 = arith.constant dense<0.000000e+00> : vector<2x32xf32>
    %163 = tpu.matmul %160, %17, %cst_44 {dimension_numbers = #tpu.dot_dimension_numbers<[1], [0], [0], [1], [0, 0, 1, 1], [], []>} : vector<2x32xf32>, vector<32x32xf32>, vector<2x32xf32> -> vector<2x32xf32>
    %164 = arith.addf %162, %163 : vector<2x32xf32>
    %165 = arith.negf %164 : vector<2x32xf32>
    %166 = math.exp %165 : vector<2x32xf32>
    %cst_45 = arith.constant 1.000000e+00 : f32
    %167 = vector.broadcast %cst_45 : f32 to vector<2x32xf32>
    %168 = arith.addf %167, %166 : vector<2x32xf32>
    %169 = arith.divf %167, %168 : vector<2x32xf32>
    %170 = vector.extract_strided_slice %16 {offsets = [0, 7, 0], sizes = [2, 1, 32], strides = [1, 1, 1]} : vector<2x8x32xf32> to vector<2x1x32xf32>
    %171 = vector.shape_cast %170 : vector<2x1x32xf32> to vector<2x32xf32>
    %cst_46 = arith.constant dense<0.000000e+00> : vector<2x32xf32>
    %172 = tpu.matmul %160, %18, %cst_46 {dimension_numbers = #tpu.dot_dimension_numbers<[1], [0], [0], [1], [0, 0, 1, 1], [], []>} : vector<2x32xf32>, vector<32x32xf32>, vector<2x32xf32> -> vector<2x32xf32>
    %173 = arith.addf %172, %26 : vector<2x32xf32>
    %174 = arith.mulf %169, %173 : vector<2x32xf32>
    %175 = arith.addf %171, %174 : vector<2x32xf32>
    %176 = math.tanh %175 : vector<2x32xf32>
    %177 = arith.mulf %23, %176 : vector<2x32xf32>
    %178 = arith.mulf %21, %160 : vector<2x32xf32>
    %179 = arith.addf %177, %178 : vector<2x32xf32>
    %c0_47 = arith.constant 0 : index
    %c0_48 = arith.constant 0 : index
    %180 = vector.load %arg12[%c0_47, %c0_48] : memref<2x32xf32, #tpu.memory_space<vmem>>, vector<2x32xf32>
    tpu.vector_store %arg12[%c0_47, %c0_48], %179 {strides = array<i32>} : memref<2x32xf32, #tpu.memory_space<vmem>>, vector<2x32xf32>,
    return
  }
  func.func @transform_0(%arg0: i32, %arg1: i32) -> (i32, i32, i32) {
    %c0_i32 = arith.constant 0 : i32
    %c0_i32_0 = arith.constant 0 : i32
    return %arg0, %arg1, %c0_i32 : i32, i32, i32
  }
  func.func @transform_1(%arg0: i32, %arg1: i32) -> (i32, i32) {
    %c0_i32 = arith.constant 0 : i32
    %c0_i32_0 = arith.constant 0 : i32
    return %arg0, %c0_i32 : i32, i32
  }
  func.func @transform_2(%arg0: i32, %arg1: i32) -> (i32, i32) {
    %c0_i32 = arith.constant 0 : i32
    %c0_i32_0 = arith.constant 0 : i32
    return %arg0, %c0_i32 : i32, i32
  }
  func.func @transform_3(%arg0: i32, %arg1: i32) -> (i32, i32) {
    %c0_i32 = arith.constant 0 : i32
    %c0_i32_0 = arith.constant 0 : i32
    %c0_i32_1 = arith.constant 0 : i32
    return %c0_i32, %c0_i32_0 : i32, i32
  }
  func.func @transform_4(%arg0: i32, %arg1: i32) -> (i32, i32) {
    %c0_i32 = arith.constant 0 : i32
    %c0_i32_0 = arith.constant 0 : i32
    %c0_i32_1 = arith.constant 0 : i32
    return %c0_i32, %c0_i32_0 : i32, i32
  }
  func.func @transform_5(%arg0: i32, %arg1: i32) -> (i32, i32) {
    %c0_i32 = arith.constant 0 : i32
    %c0_i32_0 = arith.constant 0 : i32
    %c0_i32_1 = arith.constant 0 : i32
    return %c0_i32, %c0_i32_0 : i32, i32
  }
  func.func @transform_6(%arg0: i32, %arg1: i32) -> (i32, i32) {
    %c0_i32 = arith.constant 0 : i32
    %c0_i32_0 = arith.constant 0 : i32
    %c0_i32_1 = arith.constant 0 : i32
    return %c0_i32, %c0_i32_0 : i32, i32
  }
  func.func @transform_7(%arg0: i32, %arg1: i32) -> (i32, i32) {
    %c0_i32 = arith.constant 0 : i32
    %c0_i32_0 = arith.constant 0 : i32
    %c0_i32_1 = arith.constant 0 : i32
    return %c0_i32, %c0_i32_0 : i32, i32
  }
  func.func @transform_8(%arg0: i32, %arg1: i32) -> (i32, i32) {
    %c0_i32 = arith.constant 0 : i32
    %c0_i32_0 = arith.constant 0 : i32
    %c0_i32_1 = arith.constant 0 : i32
    return %c0_i32, %c0_i32_0 : i32, i32
  }
  func.func @transform_9(%arg0: i32, %arg1: i32) -> (i32, i32) {
    %c0_i32 = arith.constant 0 : i32
    %c0_i32_0 = arith.constant 0 : i32
    %c0_i32_1 = arith.constant 0 : i32
    return %c0_i32, %c0_i32_0 : i32, i32
  }
  func.func @transform_10(%arg0: i32, %arg1: i32) -> (i32, i32) {
    %c0_i32 = arith.constant 0 : i32
    %c0_i32_0 = arith.constant 0 : i32
    return %arg0, %c0_i32 : i32, i32
  }
}

</mosaic_0001>

<llo_original>
// kernel: attn_gru_pallas.1
$region0: #{attn_gru_pallas.1}
  #allocation0 [shape = 'u32[]', space=smem, size = 0x4, offset = 0x4, fixed_abs, tag = 'smem constant byte address 0x4 - core index']
  #allocation1 [shape = 'u32[144,128]{1,0:T(1,128)}', space=vmem, size = 0x12000, scoped, tag = 'internal scratch']
  %s0 = inlined_call_operand.hbm [shape: f32[2,8,32], index: 0, kind: input, shape index: {}]
  %s1 = inlined_call_operand.vmem [shape: f32[2,32], index: 1, kind: input, shape index: {}]
  %s2 = inlined_call_operand.vmem [shape: f32[2,1], index: 2, kind: input, shape index: {}]
  %s3 = inlined_call_operand.hbm [shape: f32[32,32], index: 3, kind: input, shape index: {}]
  %s4 = inlined_call_operand.hbm [shape: f32[32,32], index: 4, kind: input, shape index: {}]
  %s5 = inlined_call_operand.vmem [shape: f32[1,32], index: 5, kind: input, shape index: {}]
  %s6 = inlined_call_operand.hbm [shape: f32[32,32], index: 6, kind: input, shape index: {}]
  %s7 = inlined_call_operand.vmem [shape: f32[1,32], index: 7, kind: input, shape index: {}]
  %s8 = inlined_call_operand.hbm [shape: f32[32,32], index: 8, kind: input, shape index: {}]
  %s9 = inlined_call_operand.vmem [shape: f32[1,32], index: 9, kind: input, shape index: {}]
  %s10 = inlined_call_operand.hbm [shape: f32[2,32], index: 10, kind: output, shape index: {}]
  %s11 = sld [smem:[#allocation0]]
  $region74: #{attn_gru_pallas.1} parent=0
    _
  %s13 = ssub.s32 1, %s11
  %s14 = scalar_select 0, %s13, %s11
  $region1: #{attn_gru_pallas.1} parent=0
    #allocation2 [shape = 'u8[8192]{0}', space=vmem, size = 0x2000, scoped, tag = 'input window, operand 0, single buffered']
    #allocation3 [shape = 's32[1]{0}', space=sflag, size = 0x4, scoped, tag = 'scoped memory for attn_gru_pallas.1']
    #allocation4 [shape = 's32[1]{0}', space=sflag, size = 0x4, scoped, tag = 'scoped memory for attn_gru_pallas.1']
    #allocation5 [shape = 'u8[16384]{0}', space=vmem, size = 0x4000, scoped, tag = 'input window, operand 3, single buffered']
    #allocation6 [shape = 's32[1]{0}', space=sflag, size = 0x4, scoped, tag = 'scoped memory for attn_gru_pallas.1']
    #allocation7 [shape = 'u8[16384]{0}', space=vmem, size = 0x4000, scoped, tag = 'input window, operand 4, single buffered']
    #allocation8 [shape = 'u8[16384]{0}', space=vmem, size = 0x4000, scoped, tag = 'input window, operand 6, single buffered']
    #allocation9 [shape = 's32[1]{0}', space=sflag, size = 0x4, scoped, tag = 'scoped memory for attn_gru_pallas.1']
    #allocation10 [shape = 'u8[16384]{0}', space=vmem, size = 0x4000, scoped, tag = 'input window, operand 8, single buffered']
    #allocation11 [shape = 'u8[1024]{0}', space=vmem, size = 0x400, scoped, tag = 'output window, operand 0, single buffered']
    %15 = vsyncpa [#allocation3], 0
    %16 = vsyncpa [#allocation6], 0
    %17 = vsyncpa [#allocation9], 0
    %18 = vsyncpa [#allocation4], 0
    // Predicated region
    $region2: #{attn_gru_pallas.1} parent=1 // pred_check
      _
    $region3: #{attn_gru_pallas.1} parent=1 // pred_check_branch
      %20 = sbr.rel (0) target = $region5
    $region4: #{attn_gru_pallas.1} parent=1 // pred_region
      %s22 = ssub.s32 256, 256
      %23 = vsyncadd [#allocation3], %s22
      %s24 = sshll.u32 [#allocation2], 4
      %s25 = int_to_ptr.vmem [resolvable:$true] %s24
      %30 = dma.hbm_to_vmem [thread:$0]  %s0, 256, %s25, [#allocation3], 128, 128, 8
    $region5: #{attn_gru_pallas.1} parent=1 // pred_fallthru
      _
    // Predicated region
    $region6: #{attn_gru_pallas.1} parent=1 // pred_check
      _
    $region7: #{attn_gru_pallas.1} parent=1 // pred_check_branch
      %32 = sbr.rel (0) target = $region9
    $region8: #{attn_gru_pallas.1} parent=1 // pred_region
      _
    $region9: #{attn_gru_pallas.1} parent=1 // pred_fallthru
      _
    // Predicated region
    $region10: #{attn_gru_pallas.1} parent=1 // pred_check
      _
    $region11: #{attn_gru_pallas.1} parent=1 // pred_check_branch
      %34 = sbr.rel (0) target = $region13
    $region12: #{attn_gru_pallas.1} parent=1 // pred_region
      _
    $region13: #{attn_gru_pallas.1} parent=1 // pred_fallthru
      _
    // Predicated region
    $region14: #{attn_gru_pallas.1} parent=1 // pred_check
      _
    $region15: #{attn_gru_pallas.1} parent=1 // pred_check_branch
      %36 = sbr.rel (0) target = $region17
    $region16: #{attn_gru_pallas.1} parent=1 // pred_region
      %s38 = ssub.s32 512, 512
      %39 = vsyncadd [#allocation6], %s38
      %s40 = sshll.u32 [#allocation5], 4
      %s41 = int_to_ptr.vmem [resolvable:$true] %s40
      %46 = dma.hbm_to_vmem [thread:$0]  %s3, 512, %s41, [#allocation6], 128, 128, 8
    $region17: #{attn_gru_pallas.1} parent=1 // pred_fallthru
      _
    // Predicated region
    $region18: #{attn_gru_pallas.1} parent=1 // pred_check
      _
    $region19: #{attn_gru_pallas.1} parent=1 // pred_check_branch
      %48 = sbr.rel (0) target = $region21
    $region20: #{attn_gru_pallas.1} parent=1 // pred_region
      %s50 = ssub.s32 512, 512
      %51 = vsyncadd [#allocation6], %s50
      %s52 = sshll.u32 [#allocation7], 4
      %s53 = int_to_ptr.vmem [resolvable:$true] %s52
      %58 = dma.hbm_to_vmem [thread:$0]  %s4, 512, %s53, [#allocation6], 128, 128, 8
    $region21: #{attn_gru_pallas.1} parent=1 // pred_fallthru
      _
    // Predicated region
    $region22: #{attn_gru_pallas.1} parent=1 // pred_check
      _
    $region23: #{attn_gru_pallas.1} parent=1 // pred_check_branch
      %60 = sbr.rel (0) target = $region25
    $region24: #{attn_gru_pallas.1} parent=1 // pred_region
      _
    $region25: #{attn_gru_pallas.1} parent=1 // pred_fallthru
      _
    // Predicated region
    $region26: #{attn_gru_pallas.1} parent=1 // pred_check
      _
    $region27: #{attn_gru_pallas.1} parent=1 // pred_check_branch
      %62 = sbr.rel (0) target = $region29
    $region28: #{attn_gru_pallas.1} parent=1 // pred_region
      %s64 = ssub.s32 512, 512
      %65 = vsyncadd [#allocation9], %s64
      %s66 = sshll.u32 [#allocation8], 4
      %s67 = int_to_ptr.vmem [resolvable:$true] %s66
      %72 = dma.hbm_to_vmem [thread:$0]  %s6, 512, %s67, [#allocation9], 128, 128, 8
    $region29: #{attn_gru_pallas.1} parent=1 // pred_fallthru
      _
    // Predicated region
    $region30: #{attn_gru_pallas.1} parent=1 // pred_check
      _
    $region31: #{attn_gru_pallas.1} parent=1 // pred_check_branch
      %74 = sbr.rel (0) target = $region33
    $region32: #{attn_gru_pallas.1} parent=1 // pred_region
      _
    $region33: #{attn_gru_pallas.1} parent=1 // pred_fallthru
      _
    // Predicated region
    $region34: #{attn_gru_pallas.1} parent=1 // pred_check
      _
    $region35: #{attn_gru_pallas.1} parent=1 // pred_check_branch
      %76 = sbr.rel (0) target = $region37
    $region36: #{attn_gru_pallas.1} parent=1 // pred_region
      %s78 = ssub.s32 512, 512
      %79 = vsyncadd [#allocation9], %s78
      %s80 = sshll.u32 [#allocation10], 4
      %s81 = int_to_ptr.vmem [resolvable:$true] %s80
      %86 = dma.hbm_to_vmem [thread:$0]  %s8, 512, %s81, [#allocation9], 128, 128, 8
    $region37: #{attn_gru_pallas.1} parent=1 // pred_fallthru
      _
    // Predicated region
    $region38: #{attn_gru_pallas.1} parent=1 // pred_check
      _
    $region39: #{attn_gru_pallas.1} parent=1 // pred_check_branch
      %88 = sbr.rel (0) target = $region41
    $region40: #{attn_gru_pallas.1} parent=1 // pred_region
      _
    $region41: #{attn_gru_pallas.1} parent=1 // pred_fallthru
      _
    // Predicated region
    $region42: #{attn_gru_pallas.1} parent=1 // pred_check
      _
    $region43: #{attn_gru_pallas.1} parent=1 // pred_check_branch
      %90 = sbr.rel (0) target = $region45
    $region44: #{attn_gru_pallas.1} parent=1 // pred_region
      %91 = dma.done [#allocation3], 256
    $region45: #{attn_gru_pallas.1} parent=1 // pred_fallthru
      _
    // Predicated region
    $region46: #{attn_gru_pallas.1} parent=1 // pred_check
      _
    $region47: #{attn_gru_pallas.1} parent=1 // pred_check_branch
      %93 = sbr.rel (0) target = $region49
    $region48: #{attn_gru_pallas.1} parent=1 // pred_region
      %94 = dma.done [#allocation6], 512
    $region49: #{attn_gru_pallas.1} parent=1 // pred_fallthru
      _
    // Predicated region
    $region50: #{attn_gru_pallas.1} parent=1 // pred_check
      _
    $region51: #{attn_gru_pallas.1} parent=1 // pred_check_branch
      %96 = sbr.rel (0) target = $region53
    $region52: #{attn_gru_pallas.1} parent=1 // pred_region
      %97 = dma.done [#allocation6], 512
    $region53: #{attn_gru_pallas.1} parent=1 // pred_fallthru
      _
    // Predicated region
    $region54: #{attn_gru_pallas.1} parent=1 // pred_check
      _
    $region55: #{attn_gru_pallas.1} parent=1 // pred_check_branch
      %99 = sbr.rel (0) target = $region57
    $region56: #{attn_gru_pallas.1} parent=1 // pred_region
      %100 = dma.done [#allocation9], 512
    $region57: #{attn_gru_pallas.1} parent=1 // pred_fallthru
      _
    // Predicated region
    $region58: #{attn_gru_pallas.1} parent=1 // pred_check
      _
    $region59: #{attn_gru_pallas.1} parent=1 // pred_check_branch
      %102 = sbr.rel (0) target = $region61
    $region60: #{attn_gru_pallas.1} parent=1 // pred_region
      %103 = dma.done [#allocation9], 512
    $region61: #{attn_gru_pallas.1} parent=1 // pred_fallthru
      _
    %p104 = scmp.eq.s32.totalorder 0, 0
    // Predicated region
    $region62: #{attn_gru_pallas.1} parent=1 // pred_check
      %p105 = pneg %p104
    $region63: #{attn_gru_pallas.1} parent=1 // pred_check_branch
      %107 = sbr.rel (%p105) target = $region65
    $region64: #{attn_gru_pallas.1} parent=1 // pred_region
      %v108 = vld [vmem:[%s1] sm:$0x3]
      %vm109 = vcmask 254976
      %110 = vst.msk [vmem:[#allocation11] sm:$0x3] %vm109, %v108
    $region65: #{attn_gru_pallas.1} parent=1 // pred_fallthru
      _
    %v111 = vld [vmem:[#allocation2] sm:$0xff]
    %v112 = vld [vmem:[#allocation2 + $0x8] sm:$0xff]
    %v113 = vld [vmem:[#allocation5] sm:$0xff]
    %v114 = vld [vmem:[#allocation5 + $0x8] sm:$0xff]
    %v115 = vld [vmem:[#allocation5 + $0x10] sm:$0xff]
    %v116 = vld [vmem:[#allocation5 + $0x18] sm:$0xff]
    %v117 = vld [vmem:[%s5] sm:$0x1]
    %v119 = vlaneseq
    %v120 = vshrl.u32 %v119, 7
    %v121 = vsub.s32 0, %v120
    %v122 = vrot.slane %v117, %v121
    %vm124 = vcmask 261120
    %v126 = vsel %vm124, %v111, 0
    %v129 = vsel %vm124, %v112, 0
    %131 = vmatprep.subr.mxu0 0.0
    %132 = vmatpush1.msra.mxu0 0.0
    %133 = vmatprep.subr.mxu0 0.0
    %134 = vmatpush1.msra.mxu0 0.0
    %135 = vmatprep.subr.mxu0 0.0
    %136 = vmatpush1.msra.mxu0 0.0
    %137 = vmatprep.subr.mxu0 0.0
    %138 = vmatpush1.msra.mxu0 0.0
    %139 = vmatprep.subr.mxu0 0.0
    %140 = vmatpush1.msra.mxu0 0.0
    %141 = vmatprep.subr.mxu0 0.0
    %142 = vmatpush1.msra.mxu0 0.0
    %143 = vmatprep.subr.mxu0 0.0
    %144 = vmatpush1.msra.mxu0 0.0
    %145 = vmatprep.subr.mxu0 0.0
    %146 = vmatpush1.msra.mxu0 0.0
    %147 = vmatprep.subr.mxu0 0.0
    %148 = vmatpush1.msra.mxu0 0.0
    %149 = vmatprep.subr.mxu0 0.0
    %150 = vmatpush1.msra.mxu0 0.0
    %151 = vmatprep.subr.mxu0 0.0
    %152 = vmatpush1.msra.mxu0 0.0
    %153 = vmatprep.subr.mxu0 0.0
    %154 = vmatpush1.msra.mxu0 0.0
    %155 = vmatprep.subr.mxu0 0.0
    %156 = vmatpush1.msra.mxu0 %v116
    %157 = vmatprep.subr.mxu0 0.0
    %158 = vmatpush1.msra.mxu0 %v115
    %159 = vmatprep.subr.mxu0 0.0
    %160 = vmatpush1.msra.mxu0 %v114
    %161 = vmatprep.subr.mxu0 0.0
    %162 = vmatpush1.msra.mxu0 %v113
    %163 = vmatprep.subr.mxu0 0.0
    %164 = vmatpush2.msra.mxu0 0.0
    %165 = vmatprep.subr.mxu0 0.0
    %166 = vmatpush2.msra.mxu0 0.0
    %167 = vmatprep.subr.mxu0 0.0
    %168 = vmatpush2.msra.mxu0 0.0
    %169 = vmatprep.subr.mxu0 0.0
    %170 = vmatpush2.msra.mxu0 0.0
    %171 = vmatprep.subr.mxu0 0.0
    %172 = vmatpush2.msra.mxu0 0.0
    %173 = vmatprep.subr.mxu0 0.0
    %174 = vmatpush2.msra.mxu0 0.0
    %175 = vmatprep.subr.mxu0 0.0
    %176 = vmatpush2.msra.mxu0 0.0
    %177 = vmatprep.subr.mxu0 0.0
    %178 = vmatpush2.msra.mxu0 0.0
    %179 = vmatprep.subr.mxu0 0.0
    %180 = vmatpush2.msra.mxu0 0.0
    %181 = vmatprep.subr.mxu0 0.0
    %182 = vmatpush2.msra.mxu0 0.0
    %183 = vmatprep.subr.mxu0 0.0
    %184 = vmatpush2.msra.mxu0 0.0
    %185 = vmatprep.subr.mxu0 0.0
    %186 = vmatpush2.msra.mxu0 0.0
    %187 = vmatprep.subr.mxu0 0.0
    %188 = vmatpush2.msra.mxu0 0.0
    %189 = vmatprep.subr.mxu0 0.0
    %190 = vmatpush2.msra.mxu0 0.0
    %191 = vmatprep.subr.mxu0 0.0
    %192 = vmatpush2.msra.mxu0 0.0
    %193 = vmatprep.subr.mxu0 0.0
    %194 = vmatpush2.msra.mxu0 0.0
    %195 = vmatprep.mubr.f32.mxu0 0.0
    %196 = vmatmul.mubr.f32.gmra.mxu0 %v126
    %v197 = vpop.f32.mrf.mxu0
    %v198 = vadd.f32 %v122, %v197
    %v199 = vpop.f32.mrf.mxu0
    %200 = vmatprep.mubr.f32.mxu0 0.0
    %201 = vmatmul.mubr.f32.gmra.mxu0 %v129
    %v202 = vpop.f32.mrf.mxu0
    %v203 = vadd.f32 %v122, %v202
    %v204 = vpop.f32.mrf.mxu0
    %205 = vdwg.mxu0
    %v206 = vld [vmem:[#allocation8] sm:$0xff]
    %v207 = vld [vmem:[#allocation8 + $0x8] sm:$0xff]
    %v208 = vld [vmem:[#allocation8 + $0x10] sm:$0xff]
    %v209 = vld [vmem:[#allocation8 + $0x18] sm:$0xff]
    %v210 = vld [vmem:[%s7] sm:$0x1]
    %v212 = vlaneseq
    %v213 = vshrl.u32 %v212, 7
    %v214 = vsub.s32 0, %v213
    %v215 = vrot.slane %v210, %v214
    %217 = vmatprep.subr.mxu0 0.0
    %218 = vmatpush1.msra.mxu0 0.0
    %219 = vmatprep.subr.mxu0 0.0
    %220 = vmatpush1.msra.mxu0 0.0
    %221 = vmatprep.subr.mxu0 0.0
    %222 = vmatpush1.msra.mxu0 0.0
    %223 = vmatprep.subr.mxu0 0.0
    %224 = vmatpush1.msra.mxu0 0.0
    %225 = vmatprep.subr.mxu0 0.0
    %226 = vmatpush1.msra.mxu0 0.0
    %227 = vmatprep.subr.mxu0 0.0
    %228 = vmatpush1.msra.mxu0 0.0
    %229 = vmatprep.subr.mxu0 0.0
    %230 = vmatpush1.msra.mxu0 0.0
    %231 = vmatprep.subr.mxu0 0.0
    %232 = vmatpush1.msra.mxu0 0.0
    %233 = vmatprep.subr.mxu0 0.0
    %234 = vmatpush1.msra.mxu0 0.0
    %235 = vmatprep.subr.mxu0 0.0
    %236 = vmatpush1.msra.mxu0 0.0
    %237 = vmatprep.subr.mxu0 0.0
    %238 = vmatpush1.msra.mxu0 0.0
    %239 = vmatprep.subr.mxu0 0.0
    %240 = vmatpush1.msra.mxu0 0.0
    %241 = vmatprep.subr.mxu0 0.0
    %242 = vmatpush1.msra.mxu0 %v209
    %243 = vmatprep.subr.mxu0 0.0
    %244 = vmatpush1.msra.mxu0 %v208
    %245 = vmatprep.subr.mxu0 0.0
    %246 = vmatpush1.msra.mxu0 %v207
    %247 = vmatprep.subr.mxu0 0.0
    %248 = vmatpush1.msra.mxu0 %v206
    %249 = vmatprep.subr.mxu0 0.0
    %250 = vmatpush2.msra.mxu0 0.0
    %251 = vmatprep.subr.mxu0 0.0
    %252 = vmatpush2.msra.mxu0 0.0
    %253 = vmatprep.subr.mxu0 0.0
    %254 = vmatpush2.msra.mxu0 0.0
    %255 = vmatprep.subr.mxu0 0.0
    %256 = vmatpush2.msra.mxu0 0.0
    %257 = vmatprep.subr.mxu0 0.0
    %258 = vmatpush2.msra.mxu0 0.0
    %259 = vmatprep.subr.mxu0 0.0
    %260 = vmatpush2.msra.mxu0 0.0
    %261 = vmatprep.subr.mxu0 0.0
    %262 = vmatpush2.msra.mxu0 0.0
    %263 = vmatprep.subr.mxu0 0.0
    %264 = vmatpush2.msra.mxu0 0.0
    %265 = vmatprep.subr.mxu0 0.0
    %266 = vmatpush2.msra.mxu0 0.0
    %267 = vmatprep.subr.mxu0 0.0
    %268 = vmatpush2.msra.mxu0 0.0
    %269 = vmatprep.subr.mxu0 0.0
    %270 = vmatpush2.msra.mxu0 0.0
    %271 = vmatprep.subr.mxu0 0.0
    %272 = vmatpush2.msra.mxu0 0.0
    %273 = vmatprep.subr.mxu0 0.0
    %274 = vmatpush2.msra.mxu0 0.0
    %275 = vmatprep.subr.mxu0 0.0
    %276 = vmatpush2.msra.mxu0 0.0
    %277 = vmatprep.subr.mxu0 0.0
    %278 = vmatpush2.msra.mxu0 0.0
    %279 = vmatprep.subr.mxu0 0.0
    %280 = vmatpush2.msra.mxu0 0.0
    %281 = vmatprep.mubr.f32.mxu0 0.0
    %282 = vmatmul.mubr.f32.gmra.mxu0 %v126
    %v283 = vpop.f32.mrf.mxu0
    %v284 = vadd.f32 %v215, %v283
    %v285 = vpop.f32.mrf.mxu0
    %286 = vmatprep.mubr.f32.mxu0 0.0
    %287 = vmatmul.mubr.f32.gmra.mxu0 %v129
    %v288 = vpop.f32.mrf.mxu0
    %v289 = vadd.f32 %v215, %v288
    %v290 = vpop.f32.mrf.mxu0
    %291 = vdwg.mxu0
    %v292 = vld [vmem:[#allocation7] sm:$0xff]
    %v293 = vld [vmem:[#allocation7 + $0x8] sm:$0xff]
    %v294 = vld [vmem:[#allocation7 + $0x10] sm:$0xff]
    %v295 = vld [vmem:[#allocation7 + $0x18] sm:$0xff]
    %v296 = vld [vmem:[#allocation10] sm:$0xff]
    %v297 = vld [vmem:[#allocation10 + $0x8] sm:$0xff]
    %v298 = vld [vmem:[#allocation10 + $0x10] sm:$0xff]
    %v299 = vld [vmem:[#allocation10 + $0x18] sm:$0xff]
    %v300 = vld [vmem:[%s2] sm:$0x3]
    %302 = vset.pattern.permute.xlu0 0
    %303 = vperm.xlu0 %302, %v300
    %v304 = vpop.permute.xlu0 %303
    %v306 = vsub.f32 1.0, %v304
    %v307 = vld [vmem:[%s9] sm:$0x1]
    %v309 = vlaneseq
    %v310 = vshrl.u32 %v309, 7
    %v311 = vsub.s32 0, %v310
    %v312 = vrot.slane %v307, %v311
    %v314 = vld [vmem:[#allocation11] sm:$0x3]
    %v316 = vsel %vm124, %v314, 0
    %318 = vmatprep.subr.mxu0 0.0
    %319 = vmatpush1.msra.mxu0 0.0
    %320 = vmatprep.subr.mxu0 0.0
    %321 = vmatpush1.msra.mxu0 0.0
    %322 = vmatprep.subr.mxu0 0.0
    %323 = vmatpush1.msra.mxu0 0.0
    %324 = vmatprep.subr.mxu0 0.0
    %325 = vmatpush1.msra.mxu0 0.0
    %326 = vmatprep.subr.mxu0 0.0
    %327 = vmatpush1.msra.mxu0 0.0
    %328 = vmatprep.subr.mxu0 0.0
    %329 = vmatpush1.msra.mxu0 0.0
    %330 = vmatprep.subr.mxu0 0.0
    %331 = vmatpush1.msra.mxu0 0.0
    %332 = vmatprep.subr.mxu0 0.0
    %333 = vmatpush1.msra.mxu0 0.0
    %334 = vmatprep.subr.mxu0 0.0
    %335 = vmatpush1.msra.mxu0 0.0
    %336 = vmatprep.subr.mxu0 0.0
    %337 = vmatpush1.msra.mxu0 0.0
    %338 = vmatprep.subr.mxu0 0.0
    %339 = vmatpush1.msra.mxu0 0.0
    %340 = vmatprep.subr.mxu0 0.0
    %341 = vmatpush1.msra.mxu0 0.0
    %342 = vmatprep.subr.mxu0 0.0
    %343 = vmatpush1.msra.mxu0 %v295
    %344 = vmatprep.subr.mxu0 0.0
    %345 = vmatpush1.msra.mxu0 %v294
    %346 = vmatprep.subr.mxu0 0.0
    %347 = vmatpush1.msra.mxu0 %v293
    %348 = vmatprep.subr.mxu0 0.0
    %349 = vmatpush1.msra.mxu0 %v292
    %350 = vmatprep.subr.mxu0 0.0
    %351 = vmatpush2.msra.mxu0 0.0
    %352 = vmatprep.subr.mxu0 0.0
    %353 = vmatpush2.msra.mxu0 0.0
    %354 = vmatprep.subr.mxu0 0.0
    %355 = vmatpush2.msra.mxu0 0.0
    %356 = vmatprep.subr.mxu0 0.0
    %357 = vmatpush2.msra.mxu0 0.0
    %358 = vmatprep.subr.mxu0 0.0
    %359 = vmatpush2.msra.mxu0 0.0
    %360 = vmatprep.subr.mxu0 0.0
    %361 = vmatpush2.msra.mxu0 0.0
    %362 = vmatprep.subr.mxu0 0.0
    %363 = vmatpush2.msra.mxu0 0.0
    %364 = vmatprep.subr.mxu0 0.0
    %365 = vmatpush2.msra.mxu0 0.0
    %366 = vmatprep.subr.mxu0 0.0
    %367 = vmatpush2.msra.mxu0 0.0
    %368 = vmatprep.subr.mxu0 0.0
    %369 = vmatpush2.msra.mxu0 0.0
    %370 = vmatprep.subr.mxu0 0.0
    %371 = vmatpush2.msra.mxu0 0.0
    %372 = vmatprep.subr.mxu0 0.0
    %373 = vmatpush2.msra.mxu0 0.0
    %374 = vmatprep.subr.mxu0 0.0
    %375 = vmatpush2.msra.mxu0 0.0
    %376 = vmatprep.subr.mxu0 0.0
    %377 = vmatpush2.msra.mxu0 0.0
    %378 = vmatprep.subr.mxu0 0.0
    %379 = vmatpush2.msra.mxu0 0.0
    %380 = vmatprep.subr.mxu0 0.0
    %381 = vmatpush2.msra.mxu0 0.0
    %382 = vmatprep.mubr.f32.mxu0 0.0
    %383 = vmatmul.mubr.f32.gmra.mxu0 %v316
    %v384 = vpop.f32.mrf.mxu0
    %v385 = vadd.f32 0.0, %v384
    %v386 = vpop.f32.mrf.mxu0
    %387 = vdwg.mxu0
    %v389 = vrot.slane %v385, 1
    %v392 = vadd.f32 %v198, %v385
    %v393 = vadd.f32 %v203, %v389
    %v394 = vxor.u32 %v392, 2147483648
    %v395 = vxor.u32 %v393, 2147483648
    %v396 = vmul.f32 %v394, 1.442695
    %v397 = vpow.pop %v396
    %v398 = vmul.f32 %v395, 1.442695
    %v399 = vpow.pop %v398
    %v400 = vadd.f32 %v397, 1.0
    %v401 = vadd.f32 %v399, 1.0
    %v402 = vrcp.pop %v400
    %v403 = vmul.f32 1.0, %v402
    %v404 = vrcp.pop %v401
    %v405 = vmul.f32 1.0, %v404
    %406 = vmatprep.subr.mxu0 0.0
    %407 = vmatpush1.msra.mxu0 0.0
    %408 = vmatprep.subr.mxu0 0.0
    %409 = vmatpush1.msra.mxu0 0.0
    %410 = vmatprep.subr.mxu0 0.0
    %411 = vmatpush1.msra.mxu0 0.0
    %412 = vmatprep.subr.mxu0 0.0
    %413 = vmatpush1.msra.mxu0 0.0
    %414 = vmatprep.subr.mxu0 0.0
    %415 = vmatpush1.msra.mxu0 0.0
    %416 = vmatprep.subr.mxu0 0.0
    %417 = vmatpush1.msra.mxu0 0.0
    %418 = vmatprep.subr.mxu0 0.0
    %419 = vmatpush1.msra.mxu0 0.0
    %420 = vmatprep.subr.mxu0 0.0
    %421 = vmatpush1.msra.mxu0 0.0
    %422 = vmatprep.subr.mxu0 0.0
    %423 = vmatpush1.msra.mxu0 0.0
    %424 = vmatprep.subr.mxu0 0.0
    %425 = vmatpush1.msra.mxu0 0.0
    %426 = vmatprep.subr.mxu0 0.0
    %427 = vmatpush1.msra.mxu0 0.0
    %428 = vmatprep.subr.mxu0 0.0
    %429 = vmatpush1.msra.mxu0 0.0
    %430 = vmatprep.subr.mxu0 0.0
    %431 = vmatpush1.msra.mxu0 %v299
    %432 = vmatprep.subr.mxu0 0.0
    %433 = vmatpush1.msra.mxu0 %v298
    %434 = vmatprep.subr.mxu0 0.0
    %435 = vmatpush1.msra.mxu0 %v297
    %436 = vmatprep.subr.mxu0 0.0
    %437 = vmatpush1.msra.mxu0 %v296
    %438 = vmatprep.subr.mxu0 0.0
    %439 = vmatpush2.msra.mxu0 0.0
    %440 = vmatprep.subr.mxu0 0.0
    %441 = vmatpush2.msra.mxu0 0.0
    %442 = vmatprep.subr.mxu0 0.0
    %443 = vmatpush2.msra.mxu0 0.0
    %444 = vmatprep.subr.mxu0 0.0
    %445 = vmatpush2.msra.mxu0 0.0
    %446 = vmatprep.subr.mxu0 0.0
    %447 = vmatpush2.msra.mxu0 0.0
    %448 = vmatprep.subr.mxu0 0.0
    %449 = vmatpush2.msra.mxu0 0.0
    %450 = vmatprep.subr.mxu0 0.0
    %451 = vmatpush2.msra.mxu0 0.0
    %452 = vmatprep.subr.mxu0 0.0
    %453 = vmatpush2.msra.mxu0 0.0
    %454 = vmatprep.subr.mxu0 0.0
    %455 = vmatpush2.msra.mxu0 0.0
    %456 = vmatprep.subr.mxu0 0.0
    %457 = vmatpush2.msra.mxu0 0.0
    %458 = vmatprep.subr.mxu0 0.0
    %459 = vmatpush2.msra.mxu0 0.0
    %460 = vmatprep.subr.mxu0 0.0
    %461 = vmatpush2.msra.mxu0 0.0
    %462 = vmatprep.subr.mxu0 0.0
    %463 = vmatpush2.msra.mxu0 0.0
    %464 = vmatprep.subr.mxu0 0.0
    %465 = vmatpush2.msra.mxu0 0.0
    %466 = vmatprep.subr.mxu0 0.0
    %467 = vmatpush2.msra.mxu0 0.0
    %468 = vmatprep.subr.mxu0 0.0
    %469 = vmatpush2.msra.mxu0 0.0
    %470 = vmatprep.mubr.f32.mxu0 0.0
    %471 = vmatmul.mubr.f32.gmra.mxu0 %v316
    %v472 = vpop.f32.mrf.mxu0
    %v473 = vadd.f32 %v312, %v472
    %v474 = vpop.f32.mrf.mxu0
    %475 = vdwg.mxu0
    %v477 = vrot.slane %v473, 1
    %v480 = vmul.f32 %v403, %v473
    %v481 = vmul.f32 %v405, %v477
    %v482 = vadd.f32 %v284, %v480
    %v483 = vadd.f32 %v289, %v481
    %v484 = vtanh.pop %v482
    %v485 = vtanh.pop %v483
    %v488 = vrot.slane %v485, 7
    %vm489 = vcmask 1041409
    %v490 = vsel %vm489, %v488, %v484
    %v492 = vmul.f32 %v306, %v490
    %v493 = vmul.f32 %v304, %v314
    %v494 = vadd.f32 %v492, %v493
    %v496 = vsel %vm124, %v494, 0
    %498 = vmatprep.subr.mxu0 0.0
    %499 = vmatpush1.msra.mxu0 0.0
    %500 = vmatprep.subr.mxu0 0.0
    %501 = vmatpush1.msra.mxu0 0.0
    %502 = vmatprep.subr.mxu0 0.0
    %503 = vmatpush1.msra.mxu0 0.0
    %504 = vmatprep.subr.mxu0 0.0
    %505 = vmatpush1.msra.mxu0 0.0
    %506 = vmatprep.subr.mxu0 0.0
    %507 = vmatpush1.msra.mxu0 0.0
    %508 = vmatprep.subr.mxu0 0.0
    %509 = vmatpush1.msra.mxu0 0.0
    %510 = vmatprep.subr.mxu0 0.0
    %511 = vmatpush1.msra.mxu0 0.0
    %512 = vmatprep.subr.mxu0 0.0
    %513 = vmatpush1.msra.mxu0 0.0
    %514 = vmatprep.subr.mxu0 0.0
    %515 = vmatpush1.msra.mxu0 0.0
    %516 = vmatprep.subr.mxu0 0.0
    %517 = vmatpush1.msra.mxu0 0.0
    %518 = vmatprep.subr.mxu0 0.0
    %519 = vmatpush1.msra.mxu0 0.0
    %520 = vmatprep.subr.mxu0 0.0
    %521 = vmatpush1.msra.mxu0 0.0
    %522 = vmatprep.subr.mxu0 0.0
    %523 = vmatpush1.msra.mxu0 %v295
    %524 = vmatprep.subr.mxu0 0.0
    %525 = vmatpush1.msra.mxu0 %v294
    %526 = vmatprep.subr.mxu0 0.0
    %527 = vmatpush1.msra.mxu0 %v293
    %528 = vmatprep.subr.mxu0 0.0
    %529 = vmatpush1.msra.mxu0 %v292
    %530 = vmatprep.subr.mxu0 0.0
    %531 = vmatpush2.msra.mxu0 0.0
    %532 = vmatprep.subr.mxu0 0.0
    %533 = vmatpush2.msra.mxu0 0.0
    %534 = vmatprep.subr.mxu0 0.0
    %535 = vmatpush2.msra.mxu0 0.0
    %536 = vmatprep.subr.mxu0 0.0
    %537 = vmatpush2.msra.mxu0 0.0
    %538 = vmatprep.subr.mxu0 0.0
    %539 = vmatpush2.msra.mxu0 0.0
    %540 = vmatprep.subr.mxu0 0.0
    %541 = vmatpush2.msra.mxu0 0.0
    %542 = vmatprep.subr.mxu0 0.0
    %543 = vmatpush2.msra.mxu0 0.0
    %544 = vmatprep.subr.mxu0 0.0
    %545 = vmatpush2.msra.mxu0 0.0
    %546 = vmatprep.subr.mxu0 0.0
    %547 = vmatpush2.msra.mxu0 0.0
    %548 = vmatprep.subr.mxu0 0.0
    %549 = vmatpush2.msra.mxu0 0.0
    %550 = vmatprep.subr.mxu0 0.0
    %551 = vmatpush2.msra.mxu0 0.0
    %552 = vmatprep.subr.mxu0 0.0
    %553 = vmatpush2.msra.mxu0 0.0
    %554 = vmatprep.subr.mxu0 0.0
    %555 = vmatpush2.msra.mxu0 0.0
    %556 = vmatprep.subr.mxu0 0.0
    %557 = vmatpush2.msra.mxu0 0.0
    %558 = vmatprep.subr.mxu0 0.0
    %559 = vmatpush2.msra.mxu0 0.0
    %560 = vmatprep.subr.mxu0 0.0
    %561 = vmatpush2.msra.mxu0 0.0
    %562 = vmatprep.mubr.f32.mxu0 0.0
    %563 = vmatmul.mubr.f32.gmra.mxu0 %v496
    %v564 = vpop.f32.mrf.mxu0
    %v565 = vadd.f32 0.0, %v564
    %v566 = vpop.f32.mrf.mxu0
    %567 = vdwg.mxu0
    %v569 = vrot.slane %v565, 7
    %v572 = vadd.f32 %v198, %v569
    %v573 = vadd.f32 %v203, %v565
    %v574 = vxor.u32 %v572, 2147483648
    %v575 = vxor.u32 %v573, 2147483648
    %v576 = vmul.f32 %v574, 1.442695
    %v577 = vpow.pop %v576
    %v578 = vmul.f32 %v575, 1.442695
    %v579 = vpow.pop %v578
    %v580 = vadd.f32 %v577, 1.0
    %v581 = vadd.f32 %v579, 1.0
    %v582 = vrcp.pop %v580
    %v583 = vmul.f32 1.0, %v582
    %v584 = vrcp.pop %v581
    %v585 = vmul.f32 1.0, %v584
    %586 = vmatprep.subr.mxu0 0.0
    %587 = vmatpush1.msra.mxu0 0.0
    %588 = vmatprep.subr.mxu0 0.0
    %589 = vmatpush1.msra.mxu0 0.0
    %590 = vmatprep.subr.mxu0 0.0
    %591 = vmatpush1.msra.mxu0 0.0
    %592 = vmatprep.subr.mxu0 0.0
    %593 = vmatpush1.msra.mxu0 0.0
    %594 = vmatprep.subr.mxu0 0.0
    %595 = vmatpush1.msra.mxu0 0.0
    %596 = vmatprep.subr.mxu0 0.0
    %597 = vmatpush1.msra.mxu0 0.0
    %598 = vmatprep.subr.mxu0 0.0
    %599 = vmatpush1.msra.mxu0 0.0
    %600 = vmatprep.subr.mxu0 0.0
    %601 = vmatpush1.msra.mxu0 0.0
    %602 = vmatprep.subr.mxu0 0.0
    %603 = vmatpush1.msra.mxu0 0.0
    %604 = vmatprep.subr.mxu0 0.0
    %605 = vmatpush1.msra.mxu0 0.0
    %606 = vmatprep.subr.mxu0 0.0
    %607 = vmatpush1.msra.mxu0 0.0
    %608 = vmatprep.subr.mxu0 0.0
    %609 = vmatpush1.msra.mxu0 0.0
    %610 = vmatprep.subr.mxu0 0.0
    %611 = vmatpush1.msra.mxu0 %v299
    %612 = vmatprep.subr.mxu0 0.0
    %613 = vmatpush1.msra.mxu0 %v298
    %614 = vmatprep.subr.mxu0 0.0
    %615 = vmatpush1.msra.mxu0 %v297
    %616 = vmatprep.subr.mxu0 0.0
    %617 = vmatpush1.msra.mxu0 %v296
    %618 = vmatprep.subr.mxu0 0.0
    %619 = vmatpush2.msra.mxu0 0.0
    %620 = vmatprep.subr.mxu0 0.0
    %621 = vmatpush2.msra.mxu0 0.0
    %622 = vmatprep.subr.mxu0 0.0
    %623 = vmatpush2.msra.mxu0 0.0
    %624 = vmatprep.subr.mxu0 0.0
    %625 = vmatpush2.msra.mxu0 0.0
    %626 = vmatprep.subr.mxu0 0.0
    %627 = vmatpush2.msra.mxu0 0.0
    %628 = vmatprep.subr.mxu0 0.0
    %629 = vmatpush2.msra.mxu0 0.0
    %630 = vmatprep.subr.mxu0 0.0
    %631 = vmatpush2.msra.mxu0 0.0
    %632 = vmatprep.subr.mxu0 0.0
    %633 = vmatpush2.msra.mxu0 0.0
    %634 = vmatprep.subr.mxu0 0.0
    %635 = vmatpush2.msra.mxu0 0.0
    %636 = vmatprep.subr.mxu0 0.0
    %637 = vmatpush2.msra.mxu0 0.0
    %638 = vmatprep.subr.mxu0 0.0
    %639 = vmatpush2.msra.mxu0 0.0
    %640 = vmatprep.subr.mxu0 0.0
    %641 = vmatpush2.msra.mxu0 0.0
    %642 = vmatprep.subr.mxu0 0.0
    %643 = vmatpush2.msra.mxu0 0.0
    %644 = vmatprep.subr.mxu0 0.0
    %645 = vmatpush2.msra.mxu0 0.0
    %646 = vmatprep.subr.mxu0 0.0
    %647 = vmatpush2.msra.mxu0 0.0
    %648 = vmatprep.subr.mxu0 0.0
    %649 = vmatpush2.msra.mxu0 0.0
    %650 = vmatprep.mubr.f32.mxu0 0.0
    %651 = vmatmul.mubr.f32.gmra.mxu0 %v496
    %v652 = vpop.f32.mrf.mxu0
    %v653 = vadd.f32 %v312, %v652
    %v654 = vpop.f32.mrf.mxu0
    %655 = vdwg.mxu0
    %v657 = vrot.slane %v653, 7
    %v660 = vmul.f32 %v583, %v657
    %v661 = vmul.f32 %v585, %v653
    %v662 = vadd.f32 %v284, %v660
    %v663 = vadd.f32 %v289, %v661
    %v664 = vtanh.pop %v662
    %v665 = vtanh.pop %v663
    %v668 = vrot.slane %v664, 1
    %v669 = vsel %vm489, %v665, %v668
    %v671 = vmul.f32 %v306, %v669
    %v672 = vmul.f32 %v304, %v494
    %v673 = vadd.f32 %v671, %v672
    %v675 = vsel %vm124, %v673, 0
    %677 = vmatprep.subr.mxu0 0.0
    %678 = vmatpush1.msra.mxu0 0.0
    %679 = vmatprep.subr.mxu0 0.0
    %680 = vmatpush1.msra.mxu0 0.0
    %681 = vmatprep.subr.mxu0 0.0
    %682 = vmatpush1.msra.mxu0 0.0
    %683 = vmatprep.subr.mxu0 0.0
    %684 = vmatpush1.msra.mxu0 0.0
    %685 = vmatprep.subr.mxu0 0.0
    %686 = vmatpush1.msra.mxu0 0.0
    %687 = vmatprep.subr.mxu0 0.0
    %688 = vmatpush1.msra.mxu0 0.0
    %689 = vmatprep.subr.mxu0 0.0
    %690 = vmatpush1.msra.mxu0 0.0
    %691 = vmatprep.subr.mxu0 0.0
    %692 = vmatpush1.msra.mxu0 0.0
    %693 = vmatprep.subr.mxu0 0.0
    %694 = vmatpush1.msra.mxu0 0.0
    %695 = vmatprep.subr.mxu0 0.0
    %696 = vmatpush1.msra.mxu0 0.0
    %697 = vmatprep.subr.mxu0 0.0
    %698 = vmatpush1.msra.mxu0 0.0
    %699 = vmatprep.subr.mxu0 0.0
    %700 = vmatpush1.msra.mxu0 0.0
    %701 = vmatprep.subr.mxu0 0.0
    %702 = vmatpush1.msra.mxu0 %v295
    %703 = vmatprep.subr.mxu0 0.0
    %704 = vmatpush1.msra.mxu0 %v294
    %705 = vmatprep.subr.mxu0 0.0
    %706 = vmatpush1.msra.mxu0 %v293
    %707 = vmatprep.subr.mxu0 0.0
    %708 = vmatpush1.msra.mxu0 %v292
    %709 = vmatprep.subr.mxu0 0.0
    %710 = vmatpush2.msra.mxu0 0.0
    %711 = vmatprep.subr.mxu0 0.0
    %712 = vmatpush2.msra.mxu0 0.0
    %713 = vmatprep.subr.mxu0 0.0
    %714 = vmatpush2.msra.mxu0 0.0
    %715 = vmatprep.subr.mxu0 0.0
    %716 = vmatpush2.msra.mxu0 0.0
    %717 = vmatprep.subr.mxu0 0.0
    %718 = vmatpush2.msra.mxu0 0.0
    %719 = vmatprep.subr.mxu0 0.0
    %720 = vmatpush2.msra.mxu0 0.0
    %721 = vmatprep.subr.mxu0 0.0
    %722 = vmatpush2.msra.mxu0 0.0
    %723 = vmatprep.subr.mxu0 0.0
    %724 = vmatpush2.msra.mxu0 0.0
    %725 = vmatprep.subr.mxu0 0.0
    %726 = vmatpush2.msra.mxu0 0.0
    %727 = vmatprep.subr.mxu0 0.0
    %728 = vmatpush2.msra.mxu0 0.0
    %729 = vmatprep.subr.mxu0 0.0
    %730 = vmatpush2.msra.mxu0 0.0
    %731 = vmatprep.subr.mxu0 0.0
    %732 = vmatpush2.msra.mxu0 0.0
    %733 = vmatprep.subr.mxu0 0.0
    %734 = vmatpush2.msra.mxu0 0.0
    %735 = vmatprep.subr.mxu0 0.0
    %736 = vmatpush2.msra.mxu0 0.0
    %737 = vmatprep.subr.mxu0 0.0
    %738 = vmatpush2.msra.mxu0 0.0
    %739 = vmatprep.subr.mxu0 0.0
    %740 = vmatpush2.msra.mxu0 0.0
    %741 = vmatprep.mubr.f32.mxu0 0.0
    %742 = vmatmul.mubr.f32.gmra.mxu0 %v675
    %v743 = vpop.f32.mrf.mxu0
    %v744 = vadd.f32 0.0, %v743
    %v745 = vpop.f32.mrf.mxu0
    %746 = vdwg.mxu0
    %v748 = vrot.slane %v744, 6
    %v749 = vrot.slane %v744, 7
    %v752 = vadd.f32 %v198, %v748
    %v753 = vadd.f32 %v203, %v749
    %v754 = vxor.u32 %v752, 2147483648
    %v755 = vxor.u32 %v753, 2147483648
    %v756 = vmul.f32 %v754, 1.442695
    %v757 = vpow.pop %v756
    %v758 = vmul.f32 %v755, 1.442695
    %v759 = vpow.pop %v758
    %v760 = vadd.f32 %v757, 1.0
    %v761 = vadd.f32 %v759, 1.0
    %v762 = vrcp.pop %v760
    %v763 = vmul.f32 1.0, %v762
    %v764 = vrcp.pop %v761
    %v765 = vmul.f32 1.0, %v764
    %766 = vmatprep.subr.mxu0 0.0
    %767 = vmatpush1.msra.mxu0 0.0
    %768 = vmatprep.subr.mxu0 0.0
    %769 = vmatpush1.msra.mxu0 0.0
    %770 = vmatprep.subr.mxu0 0.0
    %771 = vmatpush1.msra.mxu0 0.0
    %772 = vmatprep.subr.mxu0 0.0
    %773 = vmatpush1.msra.mxu0 0.0
    %774 = vmatprep.subr.mxu0 0.0
    %775 = vmatpush1.msra.mxu0 0.0
    %776 = vmatprep.subr.mxu0 0.0
    %777 = vmatpush1.msra.mxu0 0.0
    %778 = vmatprep.subr.mxu0 0.0
    %779 = vmatpush1.msra.mxu0 0.0
    %780 = vmatprep.subr.mxu0 0.0
    %781 = vmatpush1.msra.mxu0 0.0
    %782 = vmatprep.subr.mxu0 0.0
    %783 = vmatpush1.msra.mxu0 0.0
    %784 = vmatprep.subr.mxu0 0.0
    %785 = vmatpush1.msra.mxu0 0.0
    %786 = vmatprep.subr.mxu0 0.0
    %787 = vmatpush1.msra.mxu0 0.0
    %788 = vmatprep.subr.mxu0 0.0
    %789 = vmatpush1.msra.mxu0 0.0
    %790 = vmatprep.subr.mxu0 0.0
    %791 = vmatpush1.msra.mxu0 %v299
    %792 = vmatprep.subr.mxu0 0.0
    %793 = vmatpush1.msra.mxu0 %v298
    %794 = vmatprep.subr.mxu0 0.0
    %795 = vmatpush1.msra.mxu0 %v297
    %796 = vmatprep.subr.mxu0 0.0
    %797 = vmatpush1.msra.mxu0 %v296
    %798 = vmatprep.subr.mxu0 0.0
    %799 = vmatpush2.msra.mxu0 0.0
    %800 = vmatprep.subr.mxu0 0.0
    %801 = vmatpush2.msra.mxu0 0.0
    %802 = vmatprep.subr.mxu0 0.0
    %803 = vmatpush2.msra.mxu0 0.0
    %804 = vmatprep.subr.mxu0 0.0
    %805 = vmatpush2.msra.mxu0 0.0
    %806 = vmatprep.subr.mxu0 0.0
    %807 = vmatpush2.msra.mxu0 0.0
    %808 = vmatprep.subr.mxu0 0.0
    %809 = vmatpush2.msra.mxu0 0.0
    %810 = vmatprep.subr.mxu0 0.0
    %811 = vmatpush2.msra.mxu0 0.0
    %812 = vmatprep.subr.mxu0 0.0
    %813 = vmatpush2.msra.mxu0 0.0
    %814 = vmatprep.subr.mxu0 0.0
    %815 = vmatpush2.msra.mxu0 0.0
    %816 = vmatprep.subr.mxu0 0.0
    %817 = vmatpush2.msra.mxu0 0.0
    %818 = vmatprep.subr.mxu0 0.0
    %819 = vmatpush2.msra.mxu0 0.0
    %820 = vmatprep.subr.mxu0 0.0
    %821 = vmatpush2.msra.mxu0 0.0
    %822 = vmatprep.subr.mxu0 0.0
    %823 = vmatpush2.msra.mxu0 0.0
    %824 = vmatprep.subr.mxu0 0.0
    %825 = vmatpush2.msra.mxu0 0.0
    %826 = vmatprep.subr.mxu0 0.0
    %827 = vmatpush2.msra.mxu0 0.0
    %828 = vmatprep.subr.mxu0 0.0
    %829 = vmatpush2.msra.mxu0 0.0
    %830 = vmatprep.mubr.f32.mxu0 0.0
    %831 = vmatmul.mubr.f32.gmra.mxu0 %v675
    %v832 = vpop.f32.mrf.mxu0
    %v833 = vadd.f32 %v312, %v832
    %v834 = vpop.f32.mrf.mxu0
    %835 = vdwg.mxu0
    %v837 = vrot.slane %v833, 6
    %v838 = vrot.slane %v833, 7
    %v841 = vmul.f32 %v763, %v837
    %v842 = vmul.f32 %v765, %v838
    %v843 = vadd.f32 %v284, %v841
    %v844 = vadd.f32 %v289, %v842
    %v845 = vtanh.pop %v843
    %v846 = vtanh.pop %v844
    %v849 = vrot.slane %v845, 2
    %v850 = vrot.slane %v846, 1
    %v851 = vsel %vm489, %v850, %v849
    %v853 = vmul.f32 %v306, %v851
    %v854 = vmul.f32 %v304, %v673
    %v855 = vadd.f32 %v853, %v854
    %v857 = vsel %vm124, %v855, 0
    %859 = vmatprep.subr.mxu0 0.0
    %860 = vmatpush1.msra.mxu0 0.0
    %861 = vmatprep.subr.mxu0 0.0
    %862 = vmatpush1.msra.mxu0 0.0
    %863 = vmatprep.subr.mxu0 0.0
    %864 = vmatpush1.msra.mxu0 0.0
    %865 = vmatprep.subr.mxu0 0.0
    %866 = vmatpush1.msra.mxu0 0.0
    %867 = vmatprep.subr.mxu0 0.0
    %868 = vmatpush1.msra.mxu0 0.0
    %869 = vmatprep.subr.mxu0 0.0
    %870 = vmatpush1.msra.mxu0 0.0
    %871 = vmatprep.subr.mxu0 0.0
    %872 = vmatpush1.msra.mxu0 0.0
    %873 = vmatprep.subr.mxu0 0.0
    %874 = vmatpush1.msra.mxu0 0.0
    %875 = vmatprep.subr.mxu0 0.0
    %876 = vmatpush1.msra.mxu0 0.0
    %877 = vmatprep.subr.mxu0 0.0
    %878 = vmatpush1.msra.mxu0 0.0
    %879 = vmatprep.subr.mxu0 0.0
    %880 = vmatpush1.msra.mxu0 0.0
    %881 = vmatprep.subr.mxu0 0.0
    %882 = vmatpush1.msra.mxu0 0.0
    %883 = vmatprep.subr.mxu0 0.0
    %884 = vmatpush1.msra.mxu0 %v295
    %885 = vmatprep.subr.mxu0 0.0
    %886 = vmatpush1.msra.mxu0 %v294
    %887 = vmatprep.subr.mxu0 0.0
    %888 = vmatpush1.msra.mxu0 %v293
    %889 = vmatprep.subr.mxu0 0.0
    %890 = vmatpush1.msra.mxu0 %v292
    %891 = vmatprep.subr.mxu0 0.0
    %892 = vmatpush2.msra.mxu0 0.0
    %893 = vmatprep.subr.mxu0 0.0
    %894 = vmatpush2.msra.mxu0 0.0
    %895 = vmatprep.subr.mxu0 0.0
    %896 = vmatpush2.msra.mxu0 0.0
    %897 = vmatprep.subr.mxu0 0.0
    %898 = vmatpush2.msra.mxu0 0.0
    %899 = vmatprep.subr.mxu0 0.0
    %900 = vmatpush2.msra.mxu0 0.0
    %901 = vmatprep.subr.mxu0 0.0
    %902 = vmatpush2.msra.mxu0 0.0
    %903 = vmatprep.subr.mxu0 0.0
    %904 = vmatpush2.msra.mxu0 0.0
    %905 = vmatprep.subr.mxu0 0.0
    %906 = vmatpush2.msra.mxu0 0.0
    %907 = vmatprep.subr.mxu0 0.0
    %908 = vmatpush2.msra.mxu0 0.0
    %909 = vmatprep.subr.mxu0 0.0
    %910 = vmatpush2.msra.mxu0 0.0
    %911 = vmatprep.subr.mxu0 0.0
    %912 = vmatpush2.msra.mxu0 0.0
    %913 = vmatprep.subr.mxu0 0.0
    %914 = vmatpush2.msra.mxu0 0.0
    %915 = vmatprep.subr.mxu0 0.0
    %916 = vmatpush2.msra.mxu0 0.0
    %917 = vmatprep.subr.mxu0 0.0
    %918 = vmatpush2.msra.mxu0 0.0
    %919 = vmatprep.subr.mxu0 0.0
    %920 = vmatpush2.msra.mxu0 0.0
    %921 = vmatprep.subr.mxu0 0.0
    %922 = vmatpush2.msra.mxu0 0.0
    %923 = vmatprep.mubr.f32.mxu0 0.0
    %924 = vmatmul.mubr.f32.gmra.mxu0 %v857
    %v925 = vpop.f32.mrf.mxu0
    %v926 = vadd.f32 0.0, %v925
    %v927 = vpop.f32.mrf.mxu0
    %928 = vdwg.mxu0
    %v930 = vrot.slane %v926, 5
    %v931 = vrot.slane %v926, 6
    %v934 = vadd.f32 %v198, %v930
    %v935 = vadd.f32 %v203, %v931
    %v936 = vxor.u32 %v934, 2147483648
    %v937 = vxor.u32 %v935, 2147483648
    %v938 = vmul.f32 %v936, 1.442695
    %v939 = vpow.pop %v938
    %v940 = vmul.f32 %v937, 1.442695
    %v941 = vpow.pop %v940
    %v942 = vadd.f32 %v939, 1.0
    %v943 = vadd.f32 %v941, 1.0
    %v944 = vrcp.pop %v942
    %v945 = vmul.f32 1.0, %v944
    %v946 = vrcp.pop %v943
    %v947 = vmul.f32 1.0, %v946
    %948 = vmatprep.subr.mxu0 0.0
    %949 = vmatpush1.msra.mxu0 0.0
    %950 = vmatprep.subr.mxu0 0.0
    %951 = vmatpush1.msra.mxu0 0.0
    %952 = vmatprep.subr.mxu0 0.0
    %953 = vmatpush1.msra.mxu0 0.0
    %954 = vmatprep.subr.mxu0 0.0
    %955 = vmatpush1.msra.mxu0 0.0
    %956 = vmatprep.subr.mxu0 0.0
    %957 = vmatpush1.msra.mxu0 0.0
    %958 = vmatprep.subr.mxu0 0.0
    %959 = vmatpush1.msra.mxu0 0.0
    %960 = vmatprep.subr.mxu0 0.0
    %961 = vmatpush1.msra.mxu0 0.0
    %962 = vmatprep.subr.mxu0 0.0
    %963 = vmatpush1.msra.mxu0 0.0
    %964 = vmatprep.subr.mxu0 0.0
    %965 = vmatpush1.msra.mxu0 0.0
    %966 = vmatprep.subr.mxu0 0.0
    %967 = vmatpush1.msra.mxu0 0.0
    %968 = vmatprep.subr.mxu0 0.0
    %969 = vmatpush1.msra.mxu0 0.0
    %970 = vmatprep.subr.mxu0 0.0
    %971 = vmatpush1.msra.mxu0 0.0
    %972 = vmatprep.subr.mxu0 0.0
    %973 = vmatpush1.msra.mxu0 %v299
    %974 = vmatprep.subr.mxu0 0.0
    %975 = vmatpush1.msra.mxu0 %v298
    %976 = vmatprep.subr.mxu0 0.0
    %977 = vmatpush1.msra.mxu0 %v297
    %978 = vmatprep.subr.mxu0 0.0
    %979 = vmatpush1.msra.mxu0 %v296
    %980 = vmatprep.subr.mxu0 0.0
    %981 = vmatpush2.msra.mxu0 0.0
    %982 = vmatprep.subr.mxu0 0.0
    %983 = vmatpush2.msra.mxu0 0.0
    %984 = vmatprep.subr.mxu0 0.0
    %985 = vmatpush2.msra.mxu0 0.0
    %986 = vmatprep.subr.mxu0 0.0
    %987 = vmatpush2.msra.mxu0 0.0
    %988 = vmatprep.subr.mxu0 0.0
    %989 = vmatpush2.msra.mxu0 0.0
    %990 = vmatprep.subr.mxu0 0.0
    %991 = vmatpush2.msra.mxu0 0.0
    %992 = vmatprep.subr.mxu0 0.0
    %993 = vmatpush2.msra.mxu0 0.0
    %994 = vmatprep.subr.mxu0 0.0
    %995 = vmatpush2.msra.mxu0 0.0
    %996 = vmatprep.subr.mxu0 0.0
    %997 = vmatpush2.msra.mxu0 0.0
    %998 = vmatprep.subr.mxu0 0.0
    %999 = vmatpush2.msra.mxu0 0.0
    %1000 = vmatprep.subr.mxu0 0.0
    %1001 = vmatpush2.msra.mxu0 0.0
    %1002 = vmatprep.subr.mxu0 0.0
    %1003 = vmatpush2.msra.mxu0 0.0
    %1004 = vmatprep.subr.mxu0 0.0
    %1005 = vmatpush2.msra.mxu0 0.0
    %1006 = vmatprep.subr.mxu0 0.0
    %1007 = vmatpush2.msra.mxu0 0.0
    %1008 = vmatprep.subr.mxu0 0.0
    %1009 = vmatpush2.msra.mxu0 0.0
    %1010 = vmatprep.subr.mxu0 0.0
    %1011 = vmatpush2.msra.mxu0 0.0
    %1012 = vmatprep.mubr.f32.mxu0 0.0
    %1013 = vmatmul.mubr.f32.gmra.mxu0 %v857
    %v1014 = vpop.f32.mrf.mxu0
    %v1015 = vadd.f32 %v312, %v1014
    %v1016 = vpop.f32.mrf.mxu0
    %1017 = vdwg.mxu0
    %v1019 = vrot.slane %v1015, 5
    %v1020 = vrot.slane %v1015, 6
    %v1023 = vmul.f32 %v945, %v1019
    %v1024 = vmul.f32 %v947, %v1020
    %v1025 = vadd.f32 %v284, %v1023
    %v1026 = vadd.f32 %v289, %v1024
    %v1027 = vtanh.pop %v1025
    %v1028 = vtanh.pop %v1026
    %v1031 = vrot.slane %v1027, 3
    %v1032 = vrot.slane %v1028, 2
    %v1033 = vsel %vm489, %v1032, %v1031
    %v1035 = vmul.f32 %v306, %v1033
    %v1036 = vmul.f32 %v304, %v855
    %v1037 = vadd.f32 %v1035, %v1036
    %v1039 = vsel %vm124, %v1037, 0
    %1041 = vmatprep.subr.mxu0 0.0
    %1042 = vmatpush1.msra.mxu0 0.0
    %1043 = vmatprep.subr.mxu0 0.0
    %1044 = vmatpush1.msra.mxu0 0.0
    %1045 = vmatprep.subr.mxu0 0.0
    %1046 = vmatpush1.msra.mxu0 0.0
    %1047 = vmatprep.subr.mxu0 0.0
    %1048 = vmatpush1.msra.mxu0 0.0
    %1049 = vmatprep.subr.mxu0 0.0
    %1050 = vmatpush1.msra.mxu0 0.0
    %1051 = vmatprep.subr.mxu0 0.0
    %1052 = vmatpush1.msra.mxu0 0.0
    %1053 = vmatprep.subr.mxu0 0.0
    %1054 = vmatpush1.msra.mxu0 0.0
    %1055 = vmatprep.subr.mxu0 0.0
    %1056 = vmatpush1.msra.mxu0 0.0
    %1057 = vmatprep.subr.mxu0 0.0
    %1058 = vmatpush1.msra.mxu0 0.0
    %1059 = vmatprep.subr.mxu0 0.0
    %1060 = vmatpush1.msra.mxu0 0.0
    %1061 = vmatprep.subr.mxu0 0.0
    %1062 = vmatpush1.msra.mxu0 0.0
    %1063 = vmatprep.subr.mxu0 0.0
    %1064 = vmatpush1.msra.mxu0 0.0
    %1065 = vmatprep.subr.mxu0 0.0
    %1066 = vmatpush1.msra.mxu0 %v295
    %1067 = vmatprep.subr.mxu0 0.0
    %1068 = vmatpush1.msra.mxu0 %v294
    %1069 = vmatprep.subr.mxu0 0.0
    %1070 = vmatpush1.msra.mxu0 %v293
    %1071 = vmatprep.subr.mxu0 0.0
    %1072 = vmatpush1.msra.mxu0 %v292
    %1073 = vmatprep.subr.mxu0 0.0
    %1074 = vmatpush2.msra.mxu0 0.0
    %1075 = vmatprep.subr.mxu0 0.0
    %1076 = vmatpush2.msra.mxu0 0.0
    %1077 = vmatprep.subr.mxu0 0.0
    %1078 = vmatpush2.msra.mxu0 0.0
    %1079 = vmatprep.subr.mxu0 0.0
    %1080 = vmatpush2.msra.mxu0 0.0
    %1081 = vmatprep.subr.mxu0 0.0
    %1082 = vmatpush2.msra.mxu0 0.0
    %1083 = vmatprep.subr.mxu0 0.0
    %1084 = vmatpush2.msra.mxu0 0.0
    %1085 = vmatprep.subr.mxu0 0.0
    %1086 = vmatpush2.msra.mxu0 0.0
    %1087 = vmatprep.subr.mxu0 0.0
    %1088 = vmatpush2.msra.mxu0 0.0
    %1089 = vmatprep.subr.mxu0 0.0
    %1090 = vmatpush2.msra.mxu0 0.0
    %1091 = vmatprep.subr.mxu0 0.0
    %1092 = vmatpush2.msra.mxu0 0.0
    %1093 = vmatprep.subr.mxu0 0.0
    %1094 = vmatpush2.msra.mxu0 0.0
    %1095 = vmatprep.subr.mxu0 0.0
    %1096 = vmatpush2.msra.mxu0 0.0
    %1097 = vmatprep.subr.mxu0 0.0
    %1098 = vmatpush2.msra.mxu0 0.0
    %1099 = vmatprep.subr.mxu0 0.0
    %1100 = vmatpush2.msra.mxu0 0.0
    %1101 = vmatprep.subr.mxu0 0.0
    %1102 = vmatpush2.msra.mxu0 0.0
    %1103 = vmatprep.subr.mxu0 0.0
    %1104 = vmatpush2.msra.mxu0 0.0
    %1105 = vmatprep.mubr.f32.mxu0 0.0
    %1106 = vmatmul.mubr.f32.gmra.mxu0 %v1039
    %v1107 = vpop.f32.mrf.mxu0
    %v1108 = vadd.f32 0.0, %v1107
    %v1109 = vpop.f32.mrf.mxu0
    %1110 = vdwg.mxu0
    %v1112 = vrot.slane %v1108, 4
    %v1113 = vrot.slane %v1108, 5
    %v1116 = vadd.f32 %v198, %v1112
    %v1117 = vadd.f32 %v203, %v1113
    %v1118 = vxor.u32 %v1116, 2147483648
    %v1119 = vxor.u32 %v1117, 2147483648
    %v1120 = vmul.f32 %v1118, 1.442695
    %v1121 = vpow.pop %v1120
    %v1122 = vmul.f32 %v1119, 1.442695
    %v1123 = vpow.pop %v1122
    %v1124 = vadd.f32 %v1121, 1.0
    %v1125 = vadd.f32 %v1123, 1.0
    %v1126 = vrcp.pop %v1124
    %v1127 = vmul.f32 1.0, %v1126
    %v1128 = vrcp.pop %v1125
    %v1129 = vmul.f32 1.0, %v1128
    %1130 = vmatprep.subr.mxu0 0.0
    %1131 = vmatpush1.msra.mxu0 0.0
    %1132 = vmatprep.subr.mxu0 0.0
    %1133 = vmatpush1.msra.mxu0 0.0
    %1134 = vmatprep.subr.mxu0 0.0
    %1135 = vmatpush1.msra.mxu0 0.0
    %1136 = vmatprep.subr.mxu0 0.0
    %1137 = vmatpush1.msra.mxu0 0.0
    %1138 = vmatprep.subr.mxu0 0.0
    %1139 = vmatpush1.msra.mxu0 0.0
    %1140 = vmatprep.subr.mxu0 0.0
    %1141 = vmatpush1.msra.mxu0 0.0
    %1142 = vmatprep.subr.mxu0 0.0
    %1143 = vmatpush1.msra.mxu0 0.0
    %1144 = vmatprep.subr.mxu0 0.0
    %1145 = vmatpush1.msra.mxu0 0.0
    %1146 = vmatprep.subr.mxu0 0.0
    %1147 = vmatpush1.msra.mxu0 0.0
    %1148 = vmatprep.subr.mxu0 0.0
    %1149 = vmatpush1.msra.mxu0 0.0
    %1150 = vmatprep.subr.mxu0 0.0
    %1151 = vmatpush1.msra.mxu0 0.0
    %1152 = vmatprep.subr.mxu0 0.0
    %1153 = vmatpush1.msra.mxu0 0.0
    %1154 = vmatprep.subr.mxu0 0.0
    %1155 = vmatpush1.msra.mxu0 %v299
    %1156 = vmatprep.subr.mxu0 0.0
    %1157 = vmatpush1.msra.mxu0 %v298
    %1158 = vmatprep.subr.mxu0 0.0
    %1159 = vmatpush1.msra.mxu0 %v297
    %1160 = vmatprep.subr.mxu0 0.0
    %1161 = vmatpush1.msra.mxu0 %v296
    %1162 = vmatprep.subr.mxu0 0.0
    %1163 = vmatpush2.msra.mxu0 0.0
    %1164 = vmatprep.subr.mxu0 0.0
    %1165 = vmatpush2.msra.mxu0 0.0
    %1166 = vmatprep.subr.mxu0 0.0
    %1167 = vmatpush2.msra.mxu0 0.0
    %1168 = vmatprep.subr.mxu0 0.0
    %1169 = vmatpush2.msra.mxu0 0.0
    %1170 = vmatprep.subr.mxu0 0.0
    %1171 = vmatpush2.msra.mxu0 0.0
    %1172 = vmatprep.subr.mxu0 0.0
    %1173 = vmatpush2.msra.mxu0 0.0
    %1174 = vmatprep.subr.mxu0 0.0
    %1175 = vmatpush2.msra.mxu0 0.0
    %1176 = vmatprep.subr.mxu0 0.0
    %1177 = vmatpush2.msra.mxu0 0.0
    %1178 = vmatprep.subr.mxu0 0.0
    %1179 = vmatpush2.msra.mxu0 0.0
    %1180 = vmatprep.subr.mxu0 0.0
    %1181 = vmatpush2.msra.mxu0 0.0
    %1182 = vmatprep.subr.mxu0 0.0
    %1183 = vmatpush2.msra.mxu0 0.0
    %1184 = vmatprep.subr.mxu0 0.0
    %1185 = vmatpush2.msra.mxu0 0.0
    %1186 = vmatprep.subr.mxu0 0.0
    %1187 = vmatpush2.msra.mxu0 0.0
    %1188 = vmatprep.subr.mxu0 0.0
    %1189 = vmatpush2.msra.mxu0 0.0
    %1190 = vmatprep.subr.mxu0 0.0
    %1191 = vmatpush2.msra.mxu0 0.0
    %1192 = vmatprep.subr.mxu0 0.0
    %1193 = vmatpush2.msra.mxu0 0.0
    %1194 = vmatprep.mubr.f32.mxu0 0.0
    %1195 = vmatmul.mubr.f32.gmra.mxu0 %v1039
    %v1196 = vpop.f32.mrf.mxu0
    %v1197 = vadd.f32 %v312, %v1196
    %v1198 = vpop.f32.mrf.mxu0
    %1199 = vdwg.mxu0
    %v1201 = vrot.slane %v1197, 4
    %v1202 = vrot.slane %v1197, 5
    %v1205 = vmul.f32 %v1127, %v1201
    %v1206 = vmul.f32 %v1129, %v1202
    %v1207 = vadd.f32 %v284, %v1205
    %v1208 = vadd.f32 %v289, %v1206
    %v1209 = vtanh.pop %v1207
    %v1210 = vtanh.pop %v1208
    %v1213 = vrot.slane %v1209, 4
    %v1214 = vrot.slane %v1210, 3
    %v1215 = vsel %vm489, %v1214, %v1213
    %v1217 = vmul.f32 %v306, %v1215
    %v1218 = vmul.f32 %v304, %v1037
    %v1219 = vadd.f32 %v1217, %v1218
    %v1221 = vsel %vm124, %v1219, 0
    %1223 = vmatprep.subr.mxu0 0.0
    %1224 = vmatpush1.msra.mxu0 0.0
    %1225 = vmatprep.subr.mxu0 0.0
    %1226 = vmatpush1.msra.mxu0 0.0
    %1227 = vmatprep.subr.mxu0 0.0
    %1228 = vmatpush1.msra.mxu0 0.0
    %1229 = vmatprep.subr.mxu0 0.0
    %1230 = vmatpush1.msra.mxu0 0.0
    %1231 = vmatprep.subr.mxu0 0.0
    %1232 = vmatpush1.msra.mxu0 0.0
    %1233 = vmatprep.subr.mxu0 0.0
    %1234 = vmatpush1.msra.mxu0 0.0
    %1235 = vmatprep.subr.mxu0 0.0
    %1236 = vmatpush1.msra.mxu0 0.0
    %1237 = vmatprep.subr.mxu0 0.0
    %1238 = vmatpush1.msra.mxu0 0.0
    %1239 = vmatprep.subr.mxu0 0.0
    %1240 = vmatpush1.msra.mxu0 0.0
    %1241 = vmatprep.subr.mxu0 0.0
    %1242 = vmatpush1.msra.mxu0 0.0
    %1243 = vmatprep.subr.mxu0 0.0
    %1244 = vmatpush1.msra.mxu0 0.0
    %1245 = vmatprep.subr.mxu0 0.0
    %1246 = vmatpush1.msra.mxu0 0.0
    %1247 = vmatprep.subr.mxu0 0.0
    %1248 = vmatpush1.msra.mxu0 %v295
    %1249 = vmatprep.subr.mxu0 0.0
    %1250 = vmatpush1.msra.mxu0 %v294
    %1251 = vmatprep.subr.mxu0 0.0
    %1252 = vmatpush1.msra.mxu0 %v293
    %1253 = vmatprep.subr.mxu0 0.0
    %1254 = vmatpush1.msra.mxu0 %v292
    %1255 = vmatprep.subr.mxu0 0.0
    %1256 = vmatpush2.msra.mxu0 0.0
    %1257 = vmatprep.subr.mxu0 0.0
    %1258 = vmatpush2.msra.mxu0 0.0
    %1259 = vmatprep.subr.mxu0 0.0
    %1260 = vmatpush2.msra.mxu0 0.0
    %1261 = vmatprep.subr.mxu0 0.0
    %1262 = vmatpush2.msra.mxu0 0.0
    %1263 = vmatprep.subr.mxu0 0.0
    %1264 = vmatpush2.msra.mxu0 0.0
    %1265 = vmatprep.subr.mxu0 0.0
    %1266 = vmatpush2.msra.mxu0 0.0
    %1267 = vmatprep.subr.mxu0 0.0
    %1268 = vmatpush2.msra.mxu0 0.0
    %1269 = vmatprep.subr.mxu0 0.0
    %1270 = vmatpush2.msra.mxu0 0.0
    %1271 = vmatprep.subr.mxu0 0.0
    %1272 = vmatpush2.msra.mxu0 0.0
    %1273 = vmatprep.subr.mxu0 0.0
    %1274 = vmatpush2.msra.mxu0 0.0
    %1275 = vmatprep.subr.mxu0 0.0
    %1276 = vmatpush2.msra.mxu0 0.0
    %1277 = vmatprep.subr.mxu0 0.0
    %1278 = vmatpush2.msra.mxu0 0.0
    %1279 = vmatprep.subr.mxu0 0.0
    %1280 = vmatpush2.msra.mxu0 0.0
    %1281 = vmatprep.subr.mxu0 0.0
    %1282 = vmatpush2.msra.mxu0 0.0
    %1283 = vmatprep.subr.mxu0 0.0
    %1284 = vmatpush2.msra.mxu0 0.0
    %1285 = vmatprep.subr.mxu0 0.0
    %1286 = vmatpush2.msra.mxu0 0.0
    %1287 = vmatprep.mubr.f32.mxu0 0.0
    %1288 = vmatmul.mubr.f32.gmra.mxu0 %v1221
    %v1289 = vpop.f32.mrf.mxu0
    %v1290 = vadd.f32 0.0, %v1289
    %v1291 = vpop.f32.mrf.mxu0
    %1292 = vdwg.mxu0
    %v1294 = vrot.slane %v1290, 3
    %v1295 = vrot.slane %v1290, 4
    %v1298 = vadd.f32 %v198, %v1294
    %v1299 = vadd.f32 %v203, %v1295
    %v1300 = vxor.u32 %v1298, 2147483648
    %v1301 = vxor.u32 %v1299, 2147483648
    %v1302 = vmul.f32 %v1300, 1.442695
    %v1303 = vpow.pop %v1302
    %v1304 = vmul.f32 %v1301, 1.442695
    %v1305 = vpow.pop %v1304
    %v1306 = vadd.f32 %v1303, 1.0
    %v1307 = vadd.f32 %v1305, 1.0
    %v1308 = vrcp.pop %v1306
    %v1309 = vmul.f32 1.0, %v1308
    %v1310 = vrcp.pop %v1307
    %v1311 = vmul.f32 1.0, %v1310
    %1312 = vmatprep.subr.mxu0 0.0
    %1313 = vmatpush1.msra.mxu0 0.0
    %1314 = vmatprep.subr.mxu0 0.0
    %1315 = vmatpush1.msra.mxu0 0.0
    %1316 = vmatprep.subr.mxu0 0.0
    %1317 = vmatpush1.msra.mxu0 0.0
    %1318 = vmatprep.subr.mxu0 0.0
    %1319 = vmatpush1.msra.mxu0 0.0
    %1320 = vmatprep.subr.mxu0 0.0
    %1321 = vmatpush1.msra.mxu0 0.0
    %1322 = vmatprep.subr.mxu0 0.0
    %1323 = vmatpush1.msra.mxu0 0.0
    %1324 = vmatprep.subr.mxu0 0.0
    %1325 = vmatpush1.msra.mxu0 0.0
    %1326 = vmatprep.subr.mxu0 0.0
    %1327 = vmatpush1.msra.mxu0 0.0
    %1328 = vmatprep.subr.mxu0 0.0
    %1329 = vmatpush1.msra.mxu0 0.0
    %1330 = vmatprep.subr.mxu0 0.0
    %1331 = vmatpush1.msra.mxu0 0.0
    %1332 = vmatprep.subr.mxu0 0.0
    %1333 = vmatpush1.msra.mxu0 0.0
    %1334 = vmatprep.subr.mxu0 0.0
    %1335 = vmatpush1.msra.mxu0 0.0
    %1336 = vmatprep.subr.mxu0 0.0
    %1337 = vmatpush1.msra.mxu0 %v299
    %1338 = vmatprep.subr.mxu0 0.0
    %1339 = vmatpush1.msra.mxu0 %v298
    %1340 = vmatprep.subr.mxu0 0.0
    %1341 = vmatpush1.msra.mxu0 %v297
    %1342 = vmatprep.subr.mxu0 0.0
    %1343 = vmatpush1.msra.mxu0 %v296
    %1344 = vmatprep.subr.mxu0 0.0
    %1345 = vmatpush2.msra.mxu0 0.0
    %1346 = vmatprep.subr.mxu0 0.0
    %1347 = vmatpush2.msra.mxu0 0.0
    %1348 = vmatprep.subr.mxu0 0.0
    %1349 = vmatpush2.msra.mxu0 0.0
    %1350 = vmatprep.subr.mxu0 0.0
    %1351 = vmatpush2.msra.mxu0 0.0
    %1352 = vmatprep.subr.mxu0 0.0
    %1353 = vmatpush2.msra.mxu0 0.0
    %1354 = vmatprep.subr.mxu0 0.0
    %1355 = vmatpush2.msra.mxu0 0.0
    %1356 = vmatprep.subr.mxu0 0.0
    %1357 = vmatpush2.msra.mxu0 0.0
    %1358 = vmatprep.subr.mxu0 0.0
    %1359 = vmatpush2.msra.mxu0 0.0
    %1360 = vmatprep.subr.mxu0 0.0
    %1361 = vmatpush2.msra.mxu0 0.0
    %1362 = vmatprep.subr.mxu0 0.0
    %1363 = vmatpush2.msra.mxu0 0.0
    %1364 = vmatprep.subr.mxu0 0.0
    %1365 = vmatpush2.msra.mxu0 0.0
    %1366 = vmatprep.subr.mxu0 0.0
    %1367 = vmatpush2.msra.mxu0 0.0
    %1368 = vmatprep.subr.mxu0 0.0
    %1369 = vmatpush2.msra.mxu0 0.0
    %1370 = vmatprep.subr.mxu0 0.0
    %1371 = vmatpush2.msra.mxu0 0.0
    %1372 = vmatprep.subr.mxu0 0.0
    %1373 = vmatpush2.msra.mxu0 0.0
    %1374 = vmatprep.subr.mxu0 0.0
    %1375 = vmatpush2.msra.mxu0 0.0
    %1376 = vmatprep.mubr.f32.mxu0 0.0
    %1377 = vmatmul.mubr.f32.gmra.mxu0 %v1221
    %v1378 = vpop.f32.mrf.mxu0
    %v1379 = vadd.f32 %v312, %v1378
    %v1380 = vpop.f32.mrf.mxu0
    %1381 = vdwg.mxu0
    %v1383 = vrot.slane %v1379, 3
    %v1384 = vrot.slane %v1379, 4
    %v1387 = vmul.f32 %v1309, %v1383
    %v1388 = vmul.f32 %v1311, %v1384
    %v1389 = vadd.f32 %v284, %v1387
    %v1390 = vadd.f32 %v289, %v1388
    %v1391 = vtanh.pop %v1389
    %v1392 = vtanh.pop %v1390
    %v1395 = vrot.slane %v1391, 5
    %v1396 = vrot.slane %v1392, 4
    %v1397 = vsel %vm489, %v1396, %v1395
    %v1399 = vmul.f32 %v306, %v1397
    %v1400 = vmul.f32 %v304, %v1219
    %v1401 = vadd.f32 %v1399, %v1400
    %v1403 = vsel %vm124, %v1401, 0
    %1405 = vmatprep.subr.mxu0 0.0
    %1406 = vmatpush1.msra.mxu0 0.0
    %1407 = vmatprep.subr.mxu0 0.0
    %1408 = vmatpush1.msra.mxu0 0.0
    %1409 = vmatprep.subr.mxu0 0.0
    %1410 = vmatpush1.msra.mxu0 0.0
    %1411 = vmatprep.subr.mxu0 0.0
    %1412 = vmatpush1.msra.mxu0 0.0
    %1413 = vmatprep.subr.mxu0 0.0
    %1414 = vmatpush1.msra.mxu0 0.0
    %1415 = vmatprep.subr.mxu0 0.0
    %1416 = vmatpush1.msra.mxu0 0.0
    %1417 = vmatprep.subr.mxu0 0.0
    %1418 = vmatpush1.msra.mxu0 0.0
    %1419 = vmatprep.subr.mxu0 0.0
    %1420 = vmatpush1.msra.mxu0 0.0
    %1421 = vmatprep.subr.mxu0 0.0
    %1422 = vmatpush1.msra.mxu0 0.0
    %1423 = vmatprep.subr.mxu0 0.0
    %1424 = vmatpush1.msra.mxu0 0.0
    %1425 = vmatprep.subr.mxu0 0.0
    %1426 = vmatpush1.msra.mxu0 0.0
    %1427 = vmatprep.subr.mxu0 0.0
    %1428 = vmatpush1.msra.mxu0 0.0
    %1429 = vmatprep.subr.mxu0 0.0
    %1430 = vmatpush1.msra.mxu0 %v295
    %1431 = vmatprep.subr.mxu0 0.0
    %1432 = vmatpush1.msra.mxu0 %v294
    %1433 = vmatprep.subr.mxu0 0.0
    %1434 = vmatpush1.msra.mxu0 %v293
    %1435 = vmatprep.subr.mxu0 0.0
    %1436 = vmatpush1.msra.mxu0 %v292
    %1437 = vmatprep.subr.mxu0 0.0
    %1438 = vmatpush2.msra.mxu0 0.0
    %1439 = vmatprep.subr.mxu0 0.0
    %1440 = vmatpush2.msra.mxu0 0.0
    %1441 = vmatprep.subr.mxu0 0.0
    %1442 = vmatpush2.msra.mxu0 0.0
    %1443 = vmatprep.subr.mxu0 0.0
    %1444 = vmatpush2.msra.mxu0 0.0
    %1445 = vmatprep.subr.mxu0 0.0
    %1446 = vmatpush2.msra.mxu0 0.0
    %1447 = vmatprep.subr.mxu0 0.0
    %1448 = vmatpush2.msra.mxu0 0.0
    %1449 = vmatprep.subr.mxu0 0.0
    %1450 = vmatpush2.msra.mxu0 0.0
    %1451 = vmatprep.subr.mxu0 0.0
    %1452 = vmatpush2.msra.mxu0 0.0
    %1453 = vmatprep.subr.mxu0 0.0
    %1454 = vmatpush2.msra.mxu0 0.0
    %1455 = vmatprep.subr.mxu0 0.0
    %1456 = vmatpush2.msra.mxu0 0.0
    %1457 = vmatprep.subr.mxu0 0.0
    %1458 = vmatpush2.msra.mxu0 0.0
    %1459 = vmatprep.subr.mxu0 0.0
    %1460 = vmatpush2.msra.mxu0 0.0
    %1461 = vmatprep.subr.mxu0 0.0
    %1462 = vmatpush2.msra.mxu0 0.0
    %1463 = vmatprep.subr.mxu0 0.0
    %1464 = vmatpush2.msra.mxu0 0.0
    %1465 = vmatprep.subr.mxu0 0.0
    %1466 = vmatpush2.msra.mxu0 0.0
    %1467 = vmatprep.subr.mxu0 0.0
    %1468 = vmatpush2.msra.mxu0 0.0
    %1469 = vmatprep.mubr.f32.mxu0 0.0
    %1470 = vmatmul.mubr.f32.gmra.mxu0 %v1403
    %v1471 = vpop.f32.mrf.mxu0
    %v1472 = vadd.f32 0.0, %v1471
    %v1473 = vpop.f32.mrf.mxu0
    %1474 = vdwg.mxu0
    %v1476 = vrot.slane %v1472, 2
    %v1477 = vrot.slane %v1472, 3
    %v1480 = vadd.f32 %v198, %v1476
    %v1481 = vadd.f32 %v203, %v1477
    %v1482 = vxor.u32 %v1480, 2147483648
    %v1483 = vxor.u32 %v1481, 2147483648
    %v1484 = vmul.f32 %v1482, 1.442695
    %v1485 = vpow.pop %v1484
    %v1486 = vmul.f32 %v1483, 1.442695
    %v1487 = vpow.pop %v1486
    %v1488 = vadd.f32 %v1485, 1.0
    %v1489 = vadd.f32 %v1487, 1.0
    %v1490 = vrcp.pop %v1488
    %v1491 = vmul.f32 1.0, %v1490
    %v1492 = vrcp.pop %v1489
    %v1493 = vmul.f32 1.0, %v1492
    %1494 = vmatprep.subr.mxu0 0.0
    %1495 = vmatpush1.msra.mxu0 0.0
    %1496 = vmatprep.subr.mxu0 0.0
    %1497 = vmatpush1.msra.mxu0 0.0
    %1498 = vmatprep.subr.mxu0 0.0
    %1499 = vmatpush1.msra.mxu0 0.0
    %1500 = vmatprep.subr.mxu0 0.0
    %1501 = vmatpush1.msra.mxu0 0.0
    %1502 = vmatprep.subr.mxu0 0.0
    %1503 = vmatpush1.msra.mxu0 0.0
    %1504 = vmatprep.subr.mxu0 0.0
    %1505 = vmatpush1.msra.mxu0 0.0
    %1506 = vmatprep.subr.mxu0 0.0
    %1507 = vmatpush1.msra.mxu0 0.0
    %1508 = vmatprep.subr.mxu0 0.0
    %1509 = vmatpush1.msra.mxu0 0.0
    %1510 = vmatprep.subr.mxu0 0.0
    %1511 = vmatpush1.msra.mxu0 0.0
    %1512 = vmatprep.subr.mxu0 0.0
    %1513 = vmatpush1.msra.mxu0 0.0
    %1514 = vmatprep.subr.mxu0 0.0
    %1515 = vmatpush1.msra.mxu0 0.0
    %1516 = vmatprep.subr.mxu0 0.0
    %1517 = vmatpush1.msra.mxu0 0.0
    %1518 = vmatprep.subr.mxu0 0.0
    %1519 = vmatpush1.msra.mxu0 %v299
    %1520 = vmatprep.subr.mxu0 0.0
    %1521 = vmatpush1.msra.mxu0 %v298
    %1522 = vmatprep.subr.mxu0 0.0
    %1523 = vmatpush1.msra.mxu0 %v297
    %1524 = vmatprep.subr.mxu0 0.0
    %1525 = vmatpush1.msra.mxu0 %v296
    %1526 = vmatprep.subr.mxu0 0.0
    %1527 = vmatpush2.msra.mxu0 0.0
    %1528 = vmatprep.subr.mxu0 0.0
    %1529 = vmatpush2.msra.mxu0 0.0
    %1530 = vmatprep.subr.mxu0 0.0
    %1531 = vmatpush2.msra.mxu0 0.0
    %1532 = vmatprep.subr.mxu0 0.0
    %1533 = vmatpush2.msra.mxu0 0.0
    %1534 = vmatprep.subr.mxu0 0.0
    %1535 = vmatpush2.msra.mxu0 0.0
    %1536 = vmatprep.subr.mxu0 0.0
    %1537 = vmatpush2.msra.mxu0 0.0
    %1538 = vmatprep.subr.mxu0 0.0
    %1539 = vmatpush2.msra.mxu0 0.0
    %1540 = vmatprep.subr.mxu0 0.0
    %1541 = vmatpush2.msra.mxu0 0.0
    %1542 = vmatprep.subr.mxu0 0.0
    %1543 = vmatpush2.msra.mxu0 0.0
    %1544 = vmatprep.subr.mxu0 0.0
    %1545 = vmatpush2.msra.mxu0 0.0
    %1546 = vmatprep.subr.mxu0 0.0
    %1547 = vmatpush2.msra.mxu0 0.0
    %1548 = vmatprep.subr.mxu0 0.0
    %1549 = vmatpush2.msra.mxu0 0.0
    %1550 = vmatprep.subr.mxu0 0.0
    %1551 = vmatpush2.msra.mxu0 0.0
    %1552 = vmatprep.subr.mxu0 0.0
    %1553 = vmatpush2.msra.mxu0 0.0
    %1554 = vmatprep.subr.mxu0 0.0
    %1555 = vmatpush2.msra.mxu0 0.0
    %1556 = vmatprep.subr.mxu0 0.0
    %1557 = vmatpush2.msra.mxu0 0.0
    %1558 = vmatprep.mubr.f32.mxu0 0.0
    %1559 = vmatmul.mubr.f32.gmra.mxu0 %v1403
    %v1560 = vpop.f32.mrf.mxu0
    %v1561 = vadd.f32 %v312, %v1560
    %v1562 = vpop.f32.mrf.mxu0
    %1563 = vdwg.mxu0
    %v1565 = vrot.slane %v1561, 2
    %v1566 = vrot.slane %v1561, 3
    %v1569 = vmul.f32 %v1491, %v1565
    %v1570 = vmul.f32 %v1493, %v1566
    %v1571 = vadd.f32 %v284, %v1569
    %v1572 = vadd.f32 %v289, %v1570
    %v1573 = vtanh.pop %v1571
    %v1574 = vtanh.pop %v1572
    %v1577 = vrot.slane %v1573, 6
    %v1578 = vrot.slane %v1574, 5
    %v1579 = vsel %vm489, %v1578, %v1577
    %v1581 = vmul.f32 %v306, %v1579
    %v1582 = vmul.f32 %v304, %v1401
    %v1583 = vadd.f32 %v1581, %v1582
    %v1585 = vsel %vm124, %v1583, 0
    %1587 = vmatprep.subr.mxu0 0.0
    %1588 = vmatpush1.msra.mxu0 0.0
    %1589 = vmatprep.subr.mxu0 0.0
    %1590 = vmatpush1.msra.mxu0 0.0
    %1591 = vmatprep.subr.mxu0 0.0
    %1592 = vmatpush1.msra.mxu0 0.0
    %1593 = vmatprep.subr.mxu0 0.0
    %1594 = vmatpush1.msra.mxu0 0.0
    %1595 = vmatprep.subr.mxu0 0.0
    %1596 = vmatpush1.msra.mxu0 0.0
    %1597 = vmatprep.subr.mxu0 0.0
    %1598 = vmatpush1.msra.mxu0 0.0
    %1599 = vmatprep.subr.mxu0 0.0
    %1600 = vmatpush1.msra.mxu0 0.0
    %1601 = vmatprep.subr.mxu0 0.0
    %1602 = vmatpush1.msra.mxu0 0.0
    %1603 = vmatprep.subr.mxu0 0.0
    %1604 = vmatpush1.msra.mxu0 0.0
    %1605 = vmatprep.subr.mxu0 0.0
    %1606 = vmatpush1.msra.mxu0 0.0
    %1607 = vmatprep.subr.mxu0 0.0
    %1608 = vmatpush1.msra.mxu0 0.0
    %1609 = vmatprep.subr.mxu0 0.0
    %1610 = vmatpush1.msra.mxu0 0.0
    %1611 = vmatprep.subr.mxu0 0.0
    %1612 = vmatpush1.msra.mxu0 %v295
    %1613 = vmatprep.subr.mxu0 0.0
    %1614 = vmatpush1.msra.mxu0 %v294
    %1615 = vmatprep.subr.mxu0 0.0
    %1616 = vmatpush1.msra.mxu0 %v293
    %1617 = vmatprep.subr.mxu0 0.0
    %1618 = vmatpush1.msra.mxu0 %v292
    %1619 = vmatprep.subr.mxu0 0.0
    %1620 = vmatpush2.msra.mxu0 0.0
    %1621 = vmatprep.subr.mxu0 0.0
    %1622 = vmatpush2.msra.mxu0 0.0
    %1623 = vmatprep.subr.mxu0 0.0
    %1624 = vmatpush2.msra.mxu0 0.0
    %1625 = vmatprep.subr.mxu0 0.0
    %1626 = vmatpush2.msra.mxu0 0.0
    %1627 = vmatprep.subr.mxu0 0.0
    %1628 = vmatpush2.msra.mxu0 0.0
    %1629 = vmatprep.subr.mxu0 0.0
    %1630 = vmatpush2.msra.mxu0 0.0
    %1631 = vmatprep.subr.mxu0 0.0
    %1632 = vmatpush2.msra.mxu0 0.0
    %1633 = vmatprep.subr.mxu0 0.0
    %1634 = vmatpush2.msra.mxu0 0.0
    %1635 = vmatprep.subr.mxu0 0.0
    %1636 = vmatpush2.msra.mxu0 0.0
    %1637 = vmatprep.subr.mxu0 0.0
    %1638 = vmatpush2.msra.mxu0 0.0
    %1639 = vmatprep.subr.mxu0 0.0
    %1640 = vmatpush2.msra.mxu0 0.0
    %1641 = vmatprep.subr.mxu0 0.0
    %1642 = vmatpush2.msra.mxu0 0.0
    %1643 = vmatprep.subr.mxu0 0.0
    %1644 = vmatpush2.msra.mxu0 0.0
    %1645 = vmatprep.subr.mxu0 0.0
    %1646 = vmatpush2.msra.mxu0 0.0
    %1647 = vmatprep.subr.mxu0 0.0
    %1648 = vmatpush2.msra.mxu0 0.0
    %1649 = vmatprep.subr.mxu0 0.0
    %1650 = vmatpush2.msra.mxu0 0.0
    %1651 = vmatprep.mubr.f32.mxu0 0.0
    %1652 = vmatmul.mubr.f32.gmra.mxu0 %v1585
    %v1653 = vpop.f32.mrf.mxu0
    %v1654 = vadd.f32 0.0, %v1653
    %v1655 = vpop.f32.mrf.mxu0
    %1656 = vdwg.mxu0
    %v1658 = vrot.slane %v1654, 1
    %v1659 = vrot.slane %v1654, 2
    %v1662 = vadd.f32 %v198, %v1658
    %v1663 = vadd.f32 %v203, %v1659
    %v1664 = vxor.u32 %v1662, 2147483648
    %v1665 = vxor.u32 %v1663, 2147483648
    %v1666 = vmul.f32 %v1664, 1.442695
    %v1667 = vpow.pop %v1666
    %v1668 = vmul.f32 %v1665, 1.442695
    %v1669 = vpow.pop %v1668
    %v1670 = vadd.f32 %v1667, 1.0
    %v1671 = vadd.f32 %v1669, 1.0
    %v1672 = vrcp.pop %v1670
    %v1673 = vmul.f32 1.0, %v1672
    %v1674 = vrcp.pop %v1671
    %v1675 = vmul.f32 1.0, %v1674
    %1676 = vmatprep.subr.mxu0 0.0
    %1677 = vmatpush1.msra.mxu0 0.0
    %1678 = vmatprep.subr.mxu0 0.0
    %1679 = vmatpush1.msra.mxu0 0.0
    %1680 = vmatprep.subr.mxu0 0.0
    %1681 = vmatpush1.msra.mxu0 0.0
    %1682 = vmatprep.subr.mxu0 0.0
    %1683 = vmatpush1.msra.mxu0 0.0
    %1684 = vmatprep.subr.mxu0 0.0
    %1685 = vmatpush1.msra.mxu0 0.0
    %1686 = vmatprep.subr.mxu0 0.0
    %1687 = vmatpush1.msra.mxu0 0.0
    %1688 = vmatprep.subr.mxu0 0.0
    %1689 = vmatpush1.msra.mxu0 0.0
    %1690 = vmatprep.subr.mxu0 0.0
    %1691 = vmatpush1.msra.mxu0 0.0
    %1692 = vmatprep.subr.mxu0 0.0
    %1693 = vmatpush1.msra.mxu0 0.0
    %1694 = vmatprep.subr.mxu0 0.0
    %1695 = vmatpush1.msra.mxu0 0.0
    %1696 = vmatprep.subr.mxu0 0.0
    %1697 = vmatpush1.msra.mxu0 0.0
    %1698 = vmatprep.subr.mxu0 0.0
    %1699 = vmatpush1.msra.mxu0 0.0
    %1700 = vmatprep.subr.mxu0 0.0
    %1701 = vmatpush1.msra.mxu0 %v299
    %1702 = vmatprep.subr.mxu0 0.0
    %1703 = vmatpush1.msra.mxu0 %v298
    %1704 = vmatprep.subr.mxu0 0.0
    %1705 = vmatpush1.msra.mxu0 %v297
    %1706 = vmatprep.subr.mxu0 0.0
    %1707 = vmatpush1.msra.mxu0 %v296
    %1708 = vmatprep.subr.mxu0 0.0
    %1709 = vmatpush2.msra.mxu0 0.0
    %1710 = vmatprep.subr.mxu0 0.0
    %1711 = vmatpush2.msra.mxu0 0.0
    %1712 = vmatprep.subr.mxu0 0.0
    %1713 = vmatpush2.msra.mxu0 0.0
    %1714 = vmatprep.subr.mxu0 0.0
    %1715 = vmatpush2.msra.mxu0 0.0
    %1716 = vmatprep.subr.mxu0 0.0
    %1717 = vmatpush2.msra.mxu0 0.0
    %1718 = vmatprep.subr.mxu0 0.0
    %1719 = vmatpush2.msra.mxu0 0.0
    %1720 = vmatprep.subr.mxu0 0.0
    %1721 = vmatpush2.msra.mxu0 0.0
    %1722 = vmatprep.subr.mxu0 0.0
    %1723 = vmatpush2.msra.mxu0 0.0
    %1724 = vmatprep.subr.mxu0 0.0
    %1725 = vmatpush2.msra.mxu0 0.0
    %1726 = vmatprep.subr.mxu0 0.0
    %1727 = vmatpush2.msra.mxu0 0.0
    %1728 = vmatprep.subr.mxu0 0.0
    %1729 = vmatpush2.msra.mxu0 0.0
    %1730 = vmatprep.subr.mxu0 0.0
    %1731 = vmatpush2.msra.mxu0 0.0
    %1732 = vmatprep.subr.mxu0 0.0
    %1733 = vmatpush2.msra.mxu0 0.0
    %1734 = vmatprep.subr.mxu0 0.0
    %1735 = vmatpush2.msra.mxu0 0.0
    %1736 = vmatprep.subr.mxu0 0.0
    %1737 = vmatpush2.msra.mxu0 0.0
    %1738 = vmatprep.subr.mxu0 0.0
    %1739 = vmatpush2.msra.mxu0 0.0
    %1740 = vmatprep.mubr.f32.mxu0 0.0
    %1741 = vmatmul.mubr.f32.gmra.mxu0 %v1585
    %v1742 = vpop.f32.mrf.mxu0
    %v1743 = vadd.f32 %v312, %v1742
    %v1744 = vpop.f32.mrf.mxu0
    %1745 = vdwg.mxu0
    %v1747 = vrot.slane %v1743, 1
    %v1748 = vrot.slane %v1743, 2
    %v1751 = vmul.f32 %v1673, %v1747
    %v1752 = vmul.f32 %v1675, %v1748
    %v1753 = vadd.f32 %v284, %v1751
    %v1754 = vadd.f32 %v289, %v1752
    %v1755 = vtanh.pop %v1753
    %v1756 = vtanh.pop %v1754
    %v1759 = vrot.slane %v1755, 7
    %v1760 = vrot.slane %v1756, 6
    %v1761 = vsel %vm489, %v1760, %v1759
    %v1763 = vmul.f32 %v306, %v1761
    %v1764 = vmul.f32 %v304, %v1583
    %v1765 = vadd.f32 %v1763, %v1764
    %vm1766 = vcmask 254976
    %1767 = vst.msk [vmem:[#allocation11] sm:$0x3] %vm1766, %v1765
    // Predicated region
    $region66: #{attn_gru_pallas.1} parent=1 // pred_check
      _
    $region67: #{attn_gru_pallas.1} parent=1 // pred_check_branch
      %1769 = sbr.rel (0) target = $region69
    $region68: #{attn_gru_pallas.1} parent=1 // pred_region
      %s1771 = ssub.s32 32, 32
      %1772 = vsyncadd [#allocation4], %s1771
      %s1774 = sshll.u32 [#allocation11], 4
      %s1775 = int_to_ptr.vmem [resolvable:$true] %s1774
      %1777 = dma.vmem_to_hbm [thread:$0]  %s1775, 32, %s10, [#allocation4]
    $region69: #{attn_gru_pallas.1} parent=1 // pred_fallthru
      _
    // Predicated region
    $region70: #{attn_gru_pallas.1} parent=1 // pred_check
      _
    $region71: #{attn_gru_pallas.1} parent=1 // pred_check_branch
      %1779 = sbr.rel (0) target = $region73
    $region72: #{attn_gru_pallas.1} parent=1 // pred_region
      %1780 = dma.done [#allocation4], 32
    $region73: #{attn_gru_pallas.1} parent=1 // pred_fallthru
      _
    %1781 = vsyncpa [#allocation3], 1
    %1782 = vsyncpa [#allocation6], 1
    %1783 = vsyncpa [#allocation9], 1
    %1784 = vsyncpa [#allocation4], 1

</llo_original>
